<compile_context>
chip_gen: v7x
topology: tpu7x:2x2x1
jax: 0.10.0
libtpu: 0.0.40
codegen_flags: <defaults>
</compile_context>

<pallas_src>
import jax
import jax.numpy as jnp
from jax.experimental import pallas as pl
from jax.experimental.pallas import tpu as pltpu


# ---------------------------------------------------------------------------
# Kernel
# ---------------------------------------------------------------------------
def _gru_kernel(x_ref, h0_ref, wx0_ref, wxi_ref, whzr_ref, whg_ref, b_ref,
                aw_ref, ab_ref, y_ref, hfin_ref, h_scr, proj_scr, seq_scr):
    """One grid step = Ts timesteps of the full L-layer GRU for one batch block.

    Time-major, lane-padded layouts:
      x_ref    : (Ts, Bb, Xp)          whzr_ref : (L, Hp, 2*Hp)   bf16
      h0_ref   : (L, Bb, Hp)           whg_ref  : (L, Hp, Hp)     bf16
      wx0_ref  : (Xp, 3*Hp)    bf16    b_ref    : (L, 1, 3*Hp)    f32
      wxi_ref  : (L, Hp, 3*Hp) bf16    aw_ref   : (Hp, Op) bf16,  ab_ref: (1, Op) f32
      y_ref    : (Ts, Bb, Op)          hfin_ref : (L, Bb, Hp)
      h_scr    : (L, Bb, Hp)    f32    carried hidden state (across time blocks)
      proj_scr : (Ts*Bb, 3*Hp)  f32    per-layer input projection (+ biases)
      seq_scr  : (Ts*Bb, Hp)    f32    current layer's output sequence
    """
    Ts, Bb, Xp = x_ref.shape
    L = h0_ref.shape[0]
    Hp = h0_ref.shape[2]
    mm_dtype = wx0_ref.dtype            # bf16 MXU inputs, f32 accumulation/state

    t_blk = pl.program_id(1)            # time-block index (inner, "arbitrary")

    @pl.when(t_blk == 0)
    def _init():                        # (re)load initial hidden state per batch block
        h_scr[...] = h0_ref[...].astype(jnp.float32)

    for l in range(L):                  # static layer loop (layer-major)
        # (1) Whole-block input->hidden projection: ONE GEMM with M = Ts*Bb
        #     rows; the per-gate biases are folded in here once (not re-added
        #     / re-broadcast every timestep).
        if l == 0:
            inp = x_ref[...].reshape(Ts * Bb, Xp).astype(mm_dtype)
            wx = wx0_ref[...]
        else:
            inp = seq_scr[...].astype(mm_dtype)
            wx = wxi_ref[l]
        proj_scr[...] = (
            jnp.dot(inp, wx, preferred_element_type=jnp.float32) + b_ref[l])

        # (2) Sequential recurrence: only the small (Bb,Hp)@(Hp,*) matmuls stay
        #     on the serial critical path.  pl.loop (scf.for) keeps live
        #     ranges bounded - no static Ts unroll, no vreg-spill blowup.
        @pl.loop(0, Ts)
        def _step(t):
            row = pl.multiple_of(t * Bb, Bb)                # Bb is a multiple of 8
            h = h_scr[l]                                    # (Bb, Hp) f32
            pt = proj_scr[pl.ds(row, Bb), :]                # (Bb, 3*Hp) f32
            zr = jax.nn.sigmoid(
                pt[:, :2 * Hp]
                + jnp.dot(h.astype(mm_dtype), whzr_ref[l],
                          preferred_element_type=jnp.float32))
            z = zr[:, :Hp]
            r = zr[:, Hp:]
            g = jnp.tanh(
                pt[:, 2 * Hp:]
                + jnp.dot((r * h).astype(mm_dtype), whg_ref[l],
                          preferred_element_type=jnp.float32))
            h_new = h * z + (1.0 - z) * g
            h_scr[l] = h_new
            seq_scr[pl.ds(row, Bb), :] = h_new
        # TODO(synk): nn.Dropout with p>0 (training mode) not implemented; p=0 -> identity.

    # (3) Affine head for the whole block: ONE GEMM, lane-dense Op output.
    y = (jnp.dot(seq_scr[...].astype(mm_dtype), aw_ref[...],
                 preferred_element_type=jnp.float32) + ab_ref[...])
    y_ref[...] = y.reshape(Ts, Bb, y_ref.shape[2]).astype(y_ref.dtype)

    # Write the running hidden state every grid step (robust under any output
    # writeback semantics); the last time block leaves the final state.
    hfin_ref[...] = h_scr[...].astype(hfin_ref.dtype)


# ---------------------------------------------------------------------------
# Wrapper / weight packing
# ---------------------------------------------------------------------------
def _round_up(n, m):
    return ((n + m - 1) // m) * m


def _divisors(n):
    return [d for d in range(1, n + 1) if n % d == 0]


def pack_gru_params(params, lane=128, matmul_dtype=jnp.bfloat16):
    """Fuse and lane-pad the GRU weights for the Pallas kernel.

    Per layer the six gate matmuls become:
        proj = x_seq @ Wx_[z|r|g] + b_[z|r|g]     (one wide GEMM per time block)
        zr   = sigmoid(proj[:, :2H] + h    @ Wh_[z|r])
        g    = tanh   (proj[:, 2H:] + (r*h) @ Wh_g)
    All feature dims are zero-padded to multiples of `lane`; padded hidden
    columns stay exactly zero through the recurrence as long as the initial
    hidden state is zero-padded (the forward wrapper guarantees this).
    """
    layers = params["layers"]
    aw, ab = params["affine"]
    H, O = aw.shape
    L = len(layers)
    I = layers[0][0].shape[0]

    Hp = _round_up(H, lane)
    Xp = _round_up(I, lane)
    Op = _round_up(O, lane)

    wx0 = jnp.zeros((Xp, 3 * Hp), jnp.float32)        # layer 0 input projection
    wxi = jnp.zeros((L, Hp, 3 * Hp), jnp.float32)     # layers 1..L-1 (slot 0 unused)
    whzr = jnp.zeros((L, Hp, 2 * Hp), jnp.float32)
    whg = jnp.zeros((L, Hp, Hp), jnp.float32)
    b = jnp.zeros((L, 1, 3 * Hp), jnp.float32)

    for l, (Wxz, bz, Whz, Wxr, br, Whr, Wxg, bg, Whg) in enumerate(layers):
        d_in = Wxz.shape[0]
        if l == 0:
            wx0 = wx0.at[:d_in, 0 * Hp:0 * Hp + H].set(Wxz)
            wx0 = wx0.at[:d_in, 1 * Hp:1 * Hp + H].set(Wxr)
            wx0 = wx0.at[:d_in, 2 * Hp:2 * Hp + H].set(Wxg)
        else:
            wxi = wxi.at[l, :d_in, 0 * Hp:0 * Hp + H].set(Wxz)
            wxi = wxi.at[l, :d_in, 1 * Hp:1 * Hp + H].set(Wxr)
            wxi = wxi.at[l, :d_in, 2 * Hp:2 * Hp + H].set(Wxg)
        whzr = whzr.at[l, :H, :H].set(Whz)
        whzr = whzr.at[l, :H, Hp:Hp + H].set(Whr)
        whg = whg.at[l, :H, :H].set(Whg)
        b = b.at[l, 0, 0 * Hp:0 * Hp + H].set(bz[0])
        b = b.at[l, 0, 1 * Hp:1 * Hp + H].set(br[0])
        b = b.at[l, 0, 2 * Hp:2 * Hp + H].set(bg[0])

    aw_p = jnp.zeros((Hp, Op), jnp.float32).at[:H, :O].set(aw)
    ab_p = jnp.zeros((1, Op), jnp.float32).at[0, :O].set(ab[0])

    return {
        "wx0": wx0.astype(matmul_dtype),
        "wxi": wxi.astype(matmul_dtype),
        "whzr": whzr.astype(matmul_dtype),
        "whg": whg.astype(matmul_dtype),
        "b": b,                                        # biases stay f32
        "aw": aw_p.astype(matmul_dtype),
        "ab": ab_p,
        "dims": (L, I, H, O, Xp, Hp, Op),
    }


def _vmem_cap_bytes(headroom=0.85):
    """Physical VMEM with headroom for compiler-internal scratch:
    v5e/v6e 128 MiB -> ~109 MiB budget, v7x 64 MiB -> ~54 MiB."""
    try:
        phys = int(pltpu.get_tpu_info().vmem_capacity_bytes)
    except Exception:
        phys = 64 * 1024 * 1024            # conservative (v7x-sized) fallback
    return int(phys * headroom)


def _vmem_need(bb, ts, dims, weight_bytes):
    L, _, _, _, Xp, Hp, Op = dims
    blocks = (ts * bb * (Xp + Op) + 2 * L * bb * Hp) * 4     # per pipeline buffer
    scratch = (L * bb * Hp + 4 * ts * bb * Hp) * 4           # h + proj(3Hp) + seq(Hp)
    # Weights are double-buffered by the default pipeline; on v7x this could be
    # halved with pipeline_mode=pl.Buffered(1) on the grid-invariant specs.
    return 2 * weight_bytes + 2 * blocks + scratch


def _choose_blocks(Bp, S, dims, weight_bytes, vmem_cap):
    # Batch rows are the M dimension of the recurrent matmuls: make the batch
    # block as large as fits, then grow the time block (amortizes grid overhead
    # and enlarges M = Bb*Ts of the input/affine GEMMs).
    bb_cands = sorted([d for d in _divisors(Bp) if d % 8 == 0], reverse=True)
    ts_cands = sorted([d for d in _divisors(S) if d <= 256], reverse=True)
    for bb in bb_cands:
        for ts in ts_cands:
            if _vmem_need(bb, ts, dims, weight_bytes) <= vmem_cap:
                return bb, ts
    return bb_cands[-1], ts_cands[-1]


def multilayer_gru_forward(x, packed, hidden_state=None, *,
                           batch_block=None, time_block=None):
    """x: (B, S, I) f32 batch-major.  hidden_state: (B, L, H) f32 or None.
    Returns (layer_output (B, S, O), hidden_state (B, L, H))."""
    B, S, I = x.shape
    L, I_w, H, O, Xp, Hp, Op = packed["dims"]
    assert I == I_w, "input feature dim does not match packed params"
    if hidden_state is None:
        hidden_state = jnp.zeros((B, L, H), x.dtype)

    # Pad batch to a multiple of 8 (sublane tile) so every block reshape and
    # dynamic sublane slice in the kernel is layout-free; zero-pad features to
    # lane width.  Zero-padded hidden columns/rows are mathematically inert.
    Bp = _round_up(B, 8)
    x_tm = jnp.pad(jnp.transpose(x, (1, 0, 2)),
                   ((0, 0), (0, Bp - B), (0, Xp - I)))           # (S, Bp, Xp)
    h0_tm = jnp.pad(jnp.transpose(hidden_state, (1, 0, 2)),
                    ((0, 0), (0, Bp - B), (0, Hp - H)))          # (L, Bp, Hp)

    weight_keys = ("wx0", "wxi", "whzr", "whg", "b", "aw", "ab")
    weight_bytes = sum(int(packed[k].size) * packed[k].dtype.itemsize
                       for k in weight_keys)
    vmem_cap = _vmem_cap_bytes()

    bb, ts = _choose_blocks(Bp, S, packed["dims"], weight_bytes, vmem_cap)
    Bb = batch_block or bb
    Ts = time_block or ts
    assert Bp % Bb == 0 and Bb % 8 == 0, "batch block must divide B and be a multiple of 8"
    assert S % Ts == 0, "time block must divide the sequence length"

    need = _vmem_need(Bb, Ts, packed["dims"], weight_bytes)
    vmem_limit = int(min(vmem_cap, max(need + (4 << 20), 16 << 20)))

    grid = (Bp // Bb, S // Ts)

    def _inv2(bi, ti):
        return (0, 0)

    def _inv3(bi, ti):
        return (0, 0, 0)

    in_specs = [
        pl.BlockSpec((Ts, Bb, Xp), lambda bi, ti: (ti, bi, 0)),
        pl.BlockSpec((L, Bb, Hp), lambda bi, ti: (0, bi, 0)),
        pl.BlockSpec(packed["wx0"].shape, _inv2),
        pl.BlockSpec(packed["wxi"].shape, _inv3),
        pl.BlockSpec(packed["whzr"].shape, _inv3),
        pl.BlockSpec(packed["whg"].shape, _inv3),
        pl.BlockSpec(packed["b"].shape, _inv3),
        pl.BlockSpec(packed["aw"].shape, _inv2),
        pl.BlockSpec(packed["ab"].shape, _inv2),
    ]
    out_specs = [
        pl.BlockSpec((Ts, Bb, Op), lambda bi, ti: (ti, bi, 0)),
        pl.BlockSpec((L, Bb, Hp), lambda bi, ti: (0, bi, 0)),
    ]
    out_shapes = (
        jax.ShapeDtypeStruct((S, Bp, Op), x.dtype),
        jax.ShapeDtypeStruct((L, Bp, Hp), x.dtype),
    )
    scratch_shapes = [
        pltpu.VMEM((L, Bb, Hp), jnp.float32),         # carried hidden state
        pltpu.VMEM((Ts * Bb, 3 * Hp), jnp.float32),   # input projection (+ bias)
        pltpu.VMEM((Ts * Bb, Hp), jnp.float32),       # layer output sequence
    ]

    y_tm, h_fin = pl.pallas_call(
        _gru_kernel,
        out_shape=out_shapes,
        grid_spec=pltpu.PrefetchScalarGridSpec(
            num_scalar_prefetch=0,
            grid=grid,
            in_specs=in_specs,
            out_specs=out_specs,
            scratch_shapes=scratch_shapes,
        ),
        compiler_params=pltpu.CompilerParams(
            # Batch blocks are independent -> shardable across TensorCores;
            # the time axis carries the recurrence and stays "arbitrary".
            dimension_semantics=("parallel", "arbitrary"),
            vmem_limit_bytes=vmem_limit,
        ),
    )(x_tm, h0_tm, packed["wx0"], packed["wxi"], packed["whzr"],
      packed["whg"], packed["b"], packed["aw"], packed["ab"])

    y = jnp.transpose(y_tm, (1, 0, 2))[:B, :, :O]
    h_out = jnp.transpose(h_fin, (1, 0, 2))[:B, :, :H]
    return y, h_out


# ---------------------------------------------------------------------------
# Parameter init + pure-JAX reference (transcription of MultilayerGRU.forward)
# ---------------------------------------------------------------------------
def init_params(key, in_dim, h_dim, out_dim, n_layers):
    """Deterministic PyTorch-Linear-style init; weights stored as (fan_in, fan_out)."""
    def linear(k, fan_in, fan_out, bias):
        kw, kb = jax.random.split(k)
        bound = 1.0 / float(fan_in) ** 0.5
        w = jax.random.uniform(kw, (fan_in, fan_out), jnp.float32, -bound, bound)
        b = (jax.random.uniform(kb, (1, fan_out), jnp.float32, -bound, bound)
             if bias else None)
        return w, b

    layers = []
    for l in range(n_layers):
        d_in = in_dim if l == 0 else h_dim
        key, *ks = jax.random.split(key, 7)
        Wxz, bz = linear(ks[0], d_in, h_dim, True)
        Whz, _ = linear(ks[1], h_dim, h_dim, False)
        Wxr, br = linear(ks[2], d_in, h_dim, True)
        Whr, _ = linear(ks[3], h_dim, h_dim, False)
        Wxg, bg = linear(ks[4], d_in, h_dim, True)
        Whg, _ = linear(ks[5], h_dim, h_dim, False)
        layers.append((Wxz, bz, Whz, Wxr, br, Whr, Wxg, bg, Whg))
    key, ka = jax.random.split(key)
    aw, ab = linear(ka, h_dim, out_dim, True)
    return {"layers": layers, "affine": (aw, ab)}


def reference_forward(x, params, hidden_state=None, matmul_dtype=None):
    """Pure-JAX transcription of MultilayerGRU.forward (dropout=0).
    If matmul_dtype is set, matmul operands are cast to it (f32 accumulation),
    mirroring the kernel's bf16 MXU inputs; matmul_dtype=None is exact f32."""
    B, S, _ = x.shape
    layers = params["layers"]
    aw, ab = params["affine"]
    L = len(layers)
    H = aw.shape[0]
    if hidden_state is None:
        hidden_state = jnp.zeros((B, L, H), x.dtype)

    def mm(a, b):
        if matmul_dtype is not None:
            a = a.astype(matmul_dtype)
            b = b.astype(matmul_dtype)
        return jnp.dot(a, b, preferred_element_type=jnp.float32)

    hs = [hidden_state[:, l, :].astype(jnp.float32) for l in range(L)]
    ys = []
    for s in range(S):
        xx = x[:, s, :].astype(jnp.float32)
        for l in range(L):
            Wxz, bz, Whz, Wxr, br, Whr, Wxg, bg, Whg = layers[l]
            h = hs[l]
            z = jax.nn.sigmoid(mm(xx, Wxz) + bz + mm(h, Whz))
            r = jax.nn.sigmoid(mm(xx, Wxr) + br + mm(h, Whr))
            g = jnp.tanh(mm(xx, Wxg) + bg + mm(r * h, Whg))
            h = h * z + (1.0 - z) * g
            hs[l] = h
            xx = h
        ys.append(mm(xx, aw) + ab)
    return jnp.stack(ys, axis=1), jnp.stack(hs, axis=1)


# ---------------------------------------------------------------------------
if __name__ == "__main__":
    B, S = 8, 8
    in_dim = out_dim = 16      # module writes affine(x) into zeros_like(input) -> out_dim == in_dim
    h_dim = 32
    n_layers = 2

    key = jax.random.PRNGKey(0)
    kx, kh, kp = jax.random.split(key, 3)
    x = jax.random.normal(kx, (B, S, in_dim), jnp.float32)
    h0 = jax.random.normal(kh, (B, n_layers, h_dim), jnp.float32)
    params = init_params(kp, in_dim, h_dim, out_dim, n_layers)

    packed = pack_gru_params(params, matmul_dtype=jnp.bfloat16)
    y, h_out = multilayer_gru_forward(x, packed, h0)
    y = jax.block_until_ready(y)
    h_out = jax.block_until_ready(h_out)

    # Compare against the module math at the same matmul precision
    # (bf16 MXU inputs, f32 accumulation / gates / state).
    y_ref, h_ref = reference_forward(x, params, h0, matmul_dtype=jnp.bfloat16)
    assert y.shape == (B, S, out_dim) and h_out.shape == (B, n_layers, h_dim)
    assert jnp.allclose(y, y_ref, rtol=5e-3, atol=5e-3)
    assert jnp.allclose(h_out, h_ref, rtol=5e-3, atol=5e-3)
    print("KERNEL_OK")
</pallas_src>

<mosaic_0001>
module attributes {stable_mosaic.version = 11 : i64} {
  func.func @_gru_kernel(%arg0: i32, %arg1: i32, %arg2: memref<8x8x128xf32, #tpu.memory_space<vmem>>, %arg3: memref<2x8x128xf32, #tpu.memory_space<vmem>>, %arg4: memref<128x384xbf16, #tpu.memory_space<vmem>>, %arg5: memref<2x128x384xbf16, #tpu.memory_space<vmem>>, %arg6: memref<2x128x256xbf16, #tpu.memory_space<vmem>>, %arg7: memref<2x128x128xbf16, #tpu.memory_space<vmem>>, %arg8: memref<2x1x384xf32, #tpu.memory_space<vmem>>, %arg9: memref<128x128xbf16, #tpu.memory_space<vmem>>, %arg10: memref<1x128xf32, #tpu.memory_space<vmem>>, %arg11: memref<8x8x128xf32, #tpu.memory_space<vmem>>, %arg12: memref<2x8x128xf32, #tpu.memory_space<vmem>>, %arg13: memref<2x8x128xf32, #tpu.memory_space<vmem>>, %arg14: memref<64x384xf32, #tpu.memory_space<vmem>>, %arg15: memref<64x128xf32, #tpu.memory_space<vmem>>) attributes {dimension_semantics = [#tpu.dimension_semantics<parallel>, #tpu.dimension_semantics<arbitrary>], iteration_bounds = array<i64: 1, 1>, scalar_prefetch = 0 : i64, scratch_operands = 3 : i64, tpu.core_type = #tpu.core_type<tc>, window_params = [{transform_indices = @transform_0, window_bounds = array<i64: 8, 8, 128>}, {transform_indices = @transform_1, window_bounds = array<i64: 2, 8, 128>}, {pipeline_mode = #tpu.pipeline_mode<synchronous>, transform_indices = @transform_2, window_bounds = array<i64: 128, 384>}, {pipeline_mode = #tpu.pipeline_mode<synchronous>, transform_indices = @transform_3, window_bounds = array<i64: 2, 128, 384>}, {pipeline_mode = #tpu.pipeline_mode<synchronous>, transform_indices = @transform_4, window_bounds = array<i64: 2, 128, 256>}, {pipeline_mode = #tpu.pipeline_mode<synchronous>, transform_indices = @transform_5, window_bounds = array<i64: 2, 128, 128>}, {pipeline_mode = #tpu.pipeline_mode<synchronous>, transform_indices = @transform_6, window_bounds = array<i64: 2, 1, 384>}, {pipeline_mode = #tpu.pipeline_mode<synchronous>, transform_indices = @transform_7, window_bounds = array<i64: 128, 128>}, {pipeline_mode = #tpu.pipeline_mode<synchronous>, transform_indices = @transform_8, window_bounds = array<i64: 1, 128>}, {transform_indices = @transform_9, window_bounds = array<i64: 8, 8, 128>}, {transform_indices = @transform_10, window_bounds = array<i64: 2, 8, 128>}]} {
    %c0_i32 = arith.constant 0 : i32
    %0 = arith.cmpi eq, %arg1, %c0_i32 : i32
    %1 = arith.extui %0 : i1 to i32
    %c0_i32_0 = arith.constant 0 : i32
    %2 = arith.cmpi ne, %1, %c0_i32_0 : i32
    scf.if %2 {
      %c0_42 = arith.constant 0 : index
      %c0_43 = arith.constant 0 : index
      %c0_44 = arith.constant 0 : index
      %36 = vector.load %arg3[%c0_42, %c0_43, %c0_44] : memref<2x8x128xf32, #tpu.memory_space<vmem>>, vector<2x8x128xf32>
      %c0_45 = arith.constant 0 : index
      %c0_46 = arith.constant 0 : index
      %c0_47 = arith.constant 0 : index
      %37 = vector.load %arg13[%c0_45, %c0_46, %c0_47] : memref<2x8x128xf32, #tpu.memory_space<vmem>>, vector<2x8x128xf32>
      tpu.vector_store %arg13[%c0_45, %c0_46, %c0_47], %36 {strides = array<i32>} : memref<2x8x128xf32, #tpu.memory_space<vmem>>, vector<2x8x128xf32>,
    } else {
    }
    %c0 = arith.constant 0 : index
    %c0_1 = arith.constant 0 : index
    %c0_2 = arith.constant 0 : index
    %3 = vector.load %arg2[%c0, %c0_1, %c0_2] : memref<8x8x128xf32, #tpu.memory_space<vmem>>, vector<8x8x128xf32>
    %4 = vector.shape_cast %3 : vector<8x8x128xf32> to vector<64x128xf32>
    %5 = arith.truncf %4 : vector<64x128xf32> to vector<64x128xbf16>
    %c0_3 = arith.constant 0 : index
    %c0_4 = arith.constant 0 : index
    %6 = vector.load %arg4[%c0_3, %c0_4] : memref<128x384xbf16, #tpu.memory_space<vmem>>, vector<128x384xbf16>
    %cst = arith.constant dense<0.000000e+00> : vector<64x384xf32>
    %7 = tpu.matmul %5, %6, %cst {dimension_numbers = #tpu.dot_dimension_numbers<[1], [0], [0], [1], [0, 0, 1, 1], [], []>} : vector<64x128xbf16>, vector<128x384xbf16>, vector<64x384xf32> -> vector<64x384xf32>
    %c0_5 = arith.constant 0 : index
    %c0_6 = arith.constant 0 : index
    %c0_7 = arith.constant 0 : index
    %8 = vector.load %arg8[%c0_5, %c0_6, %c0_7] : memref<2x1x384xf32, #tpu.memory_space<vmem>>, vector<1x1x384xf32>
    %9 = vector.shape_cast %8 : vector<1x1x384xf32> to vector<1x384xf32>
    %10 = vector.broadcast %9 : vector<1x384xf32> to vector<64x384xf32>
    %11 = arith.addf %7, %10 : vector<64x384xf32>
    %c0_8 = arith.constant 0 : index
    %c0_9 = arith.constant 0 : index
    %12 = vector.load %arg14[%c0_8, %c0_9] : memref<64x384xf32, #tpu.memory_space<vmem>>, vector<64x384xf32>
    tpu.vector_store %arg14[%c0_8, %c0_9], %11 {strides = array<i32>} : memref<64x384xf32, #tpu.memory_space<vmem>>, vector<64x384xf32>,
    %c0_i32_10 = arith.constant 0 : i32
    %c8_i32 = arith.constant 8 : i32
    %13 = arith.addi %c0_i32_10, %c8_i32 : i32
    %c1_i32 = arith.constant 1 : i32
    scf.for %arg16 = %c0_i32_10 to %13 step %c1_i32  : i32 {
      %c1_i32_42 = arith.constant 1 : i32
      %36 = arith.muli %arg16, %c1_i32_42 : i32
      %c0_i32_43 = arith.constant 0 : i32
      %37 = arith.addi %c0_i32_43, %36 : i32
      %c8_i32_44 = arith.constant 8 : i32
      %38 = arith.muli %37, %c8_i32_44 : i32
      %39 = tpu.assume_multiple %38, 8 : i32
      %c0_45 = arith.constant 0 : index
      %c0_46 = arith.constant 0 : index
      %c0_47 = arith.constant 0 : index
      %40 = vector.load %arg13[%c0_45, %c0_46, %c0_47] : memref<2x8x128xf32, #tpu.memory_space<vmem>>, vector<1x8x128xf32>
      %41 = vector.shape_cast %40 : vector<1x8x128xf32> to vector<8x128xf32>
      %42 = arith.index_cast %39 : i32 to index
      %c0_48 = arith.constant 0 : index
      %43 = vector.load %arg14[%42, %c0_48] : memref<64x384xf32, #tpu.memory_space<vmem>>, vector<8x384xf32>
      %44 = vector.extract_strided_slice %43 {offsets = [0, 0], sizes = [8, 256], strides = [1, 1]} : vector<8x384xf32> to vector<8x256xf32>
      %45 = arith.truncf %41 : vector<8x128xf32> to vector<8x128xbf16>
      %c0_49 = arith.constant 0 : index
      %c0_50 = arith.constant 0 : index
      %c0_51 = arith.constant 0 : index
      %46 = vector.load %arg6[%c0_49, %c0_50, %c0_51] : memref<2x128x256xbf16, #tpu.memory_space<vmem>>, vector<1x128x256xbf16>
      %47 = vector.shape_cast %46 : vector<1x128x256xbf16> to vector<128x256xbf16>
      %cst_52 = arith.constant dense<0.000000e+00> : vector<8x256xf32>
      %48 = tpu.matmul %45, %47, %cst_52 {dimension_numbers = #tpu.dot_dimension_numbers<[1], [0], [0], [1], [0, 0, 1, 1], [], []>} : vector<8x128xbf16>, vector<128x256xbf16>, vector<8x256xf32> -> vector<8x256xf32>
      %49 = arith.addf %44, %48 : vector<8x256xf32>
      %50 = arith.negf %49 : vector<8x256xf32>
      %51 = math.exp %50 : vector<8x256xf32>
      %cst_53 = arith.constant 1.000000e+00 : f32
      %52 = vector.broadcast %cst_53 : f32 to vector<8x256xf32>
      %53 = arith.addf %52, %51 : vector<8x256xf32>
      %54 = arith.divf %52, %53 : vector<8x256xf32>
      %55 = vector.extract_strided_slice %54 {offsets = [0, 0], sizes = [8, 128], strides = [1, 1]} : vector<8x256xf32> to vector<8x128xf32>
      %56 = vector.extract_strided_slice %54 {offsets = [0, 128], sizes = [8, 128], strides = [1, 1]} : vector<8x256xf32> to vector<8x128xf32>
      %57 = vector.extract_strided_slice %43 {offsets = [0, 256], sizes = [8, 128], strides = [1, 1]} : vector<8x384xf32> to vector<8x128xf32>
      %58 = arith.mulf %56, %41 : vector<8x128xf32>
      %59 = arith.truncf %58 : vector<8x128xf32> to vector<8x128xbf16>
      %c0_54 = arith.constant 0 : index
      %c0_55 = arith.constant 0 : index
      %c0_56 = arith.constant 0 : index
      %60 = vector.load %arg7[%c0_54, %c0_55, %c0_56] : memref<2x128x128xbf16, #tpu.memory_space<vmem>>, vector<1x128x128xbf16>
      %61 = vector.shape_cast %60 : vector<1x128x128xbf16> to vector<128x128xbf16>
      %cst_57 = arith.constant dense<0.000000e+00> : vector<8x128xf32>
      %62 = tpu.matmul %59, %61, %cst_57 {dimension_numbers = #tpu.dot_dimension_numbers<[1], [0], [0], [1], [0, 0, 1, 1], [], []>} : vector<8x128xbf16>, vector<128x128xbf16>, vector<8x128xf32> -> vector<8x128xf32>
      %63 = arith.addf %57, %62 : vector<8x128xf32>
      %64 = math.tanh %63 : vector<8x128xf32>
      %65 = arith.mulf %41, %55 : vector<8x128xf32>
      %cst_58 = arith.constant 1.000000e+00 : f32
      %66 = vector.broadcast %cst_58 : f32 to vector<8x128xf32>
      %67 = arith.subf %66, %55 : vector<8x128xf32>
      %68 = arith.mulf %67, %64 : vector<8x128xf32>
      %69 = arith.addf %65, %68 : vector<8x128xf32>
      %c0_59 = arith.constant 0 : index
      %c0_60 = arith.constant 0 : index
      %c0_61 = arith.constant 0 : index
      %70 = vector.load %arg13[%c0_59, %c0_60, %c0_61] : memref<2x8x128xf32, #tpu.memory_space<vmem>>, vector<1x8x128xf32>
      %71 = vector.shape_cast %70 : vector<1x8x128xf32> to vector<8x128xf32>
      %72 = vector.shape_cast %69 : vector<8x128xf32> to vector<1x8x128xf32>
      tpu.vector_store %arg13[%c0_59, %c0_60, %c0_61], %72 {strides = array<i32>} : memref<2x8x128xf32, #tpu.memory_space<vmem>>, vector<1x8x128xf32>,
      %73 = arith.index_cast %39 : i32 to index
      %c0_62 = arith.constant 0 : index
      %74 = vector.load %arg15[%73, %c0_62] : memref<64x128xf32, #tpu.memory_space<vmem>>, vector<8x128xf32>
      tpu.vector_store %arg15[%73, %c0_62], %69 {strides = array<i32>} : memref<64x128xf32, #tpu.memory_space<vmem>>, vector<8x128xf32>,
    }
    %c8_i32_11 = arith.constant 8 : i32
    %c0_12 = arith.constant 0 : index
    %c0_13 = arith.constant 0 : index
    %14 = vector.load %arg15[%c0_12, %c0_13] : memref<64x128xf32, #tpu.memory_space<vmem>>, vector<64x128xf32>
    %15 = arith.truncf %14 : vector<64x128xf32> to vector<64x128xbf16>
    %c1 = arith.constant 1 : index
    %c0_14 = arith.constant 0 : index
    %c0_15 = arith.constant 0 : index
    %16 = vector.load %arg5[%c1, %c0_14, %c0_15] : memref<2x128x384xbf16, #tpu.memory_space<vmem>>, vector<1x128x384xbf16>
    %17 = vector.shape_cast %16 : vector<1x128x384xbf16> to vector<128x384xbf16>
    %cst_16 = arith.constant dense<0.000000e+00> : vector<64x384xf32>
    %18 = tpu.matmul %15, %17, %cst_16 {dimension_numbers = #tpu.dot_dimension_numbers<[1], [0], [0], [1], [0, 0, 1, 1], [], []>} : vector<64x128xbf16>, vector<128x384xbf16>, vector<64x384xf32> -> vector<64x384xf32>
    %c1_17 = arith.constant 1 : index
    %c0_18 = arith.constant 0 : index
    %c0_19 = arith.constant 0 : index
    %19 = vector.load %arg8[%c1_17, %c0_18, %c0_19] : memref<2x1x384xf32, #tpu.memory_space<vmem>>, vector<1x1x384xf32>
    %20 = vector.shape_cast %19 : vector<1x1x384xf32> to vector<1x384xf32>
    %21 = vector.broadcast %20 : vector<1x384xf32> to vector<64x384xf32>
    %22 = arith.addf %18, %21 : vector<64x384xf32>
    %c0_20 = arith.constant 0 : index
    %c0_21 = arith.constant 0 : index
    %23 = vector.load %arg14[%c0_20, %c0_21] : memref<64x384xf32, #tpu.memory_space<vmem>>, vector<64x384xf32>
    tpu.vector_store %arg14[%c0_20, %c0_21], %22 {strides = array<i32>} : memref<64x384xf32, #tpu.memory_space<vmem>>, vector<64x384xf32>,
    %c0_i32_22 = arith.constant 0 : i32
    %c8_i32_23 = arith.constant 8 : i32
    %24 = arith.addi %c0_i32_22, %c8_i32_23 : i32
    %c1_i32_24 = arith.constant 1 : i32
    scf.for %arg16 = %c0_i32_22 to %24 step %c1_i32_24  : i32 {
      %c1_i32_42 = arith.constant 1 : i32
      %36 = arith.muli %arg16, %c1_i32_42 : i32
      %c0_i32_43 = arith.constant 0 : i32
      %37 = arith.addi %c0_i32_43, %36 : i32
      %c8_i32_44 = arith.constant 8 : i32
      %38 = arith.muli %37, %c8_i32_44 : i32
      %39 = tpu.assume_multiple %38, 8 : i32
      %c1_45 = arith.constant 1 : index
      %c0_46 = arith.constant 0 : index
      %c0_47 = arith.constant 0 : index
      %40 = vector.load %arg13[%c1_45, %c0_46, %c0_47] : memref<2x8x128xf32, #tpu.memory_space<vmem>>, vector<1x8x128xf32>
      %41 = vector.shape_cast %40 : vector<1x8x128xf32> to vector<8x128xf32>
      %42 = arith.index_cast %39 : i32 to index
      %c0_48 = arith.constant 0 : index
      %43 = vector.load %arg14[%42, %c0_48] : memref<64x384xf32, #tpu.memory_space<vmem>>, vector<8x384xf32>
      %44 = vector.extract_strided_slice %43 {offsets = [0, 0], sizes = [8, 256], strides = [1, 1]} : vector<8x384xf32> to vector<8x256xf32>
      %45 = arith.truncf %41 : vector<8x128xf32> to vector<8x128xbf16>
      %c1_49 = arith.constant 1 : index
      %c0_50 = arith.constant 0 : index
      %c0_51 = arith.constant 0 : index
      %46 = vector.load %arg6[%c1_49, %c0_50, %c0_51] : memref<2x128x256xbf16, #tpu.memory_space<vmem>>, vector<1x128x256xbf16>
      %47 = vector.shape_cast %46 : vector<1x128x256xbf16> to vector<128x256xbf16>
      %cst_52 = arith.constant dense<0.000000e+00> : vector<8x256xf32>
      %48 = tpu.matmul %45, %47, %cst_52 {dimension_numbers = #tpu.dot_dimension_numbers<[1], [0], [0], [1], [0, 0, 1, 1], [], []>} : vector<8x128xbf16>, vector<128x256xbf16>, vector<8x256xf32> -> vector<8x256xf32>
      %49 = arith.addf %44, %48 : vector<8x256xf32>
      %50 = arith.negf %49 : vector<8x256xf32>
      %51 = math.exp %50 : vector<8x256xf32>
      %cst_53 = arith.constant 1.000000e+00 : f32
      %52 = vector.broadcast %cst_53 : f32 to vector<8x256xf32>
      %53 = arith.addf %52, %51 : vector<8x256xf32>
      %54 = arith.divf %52, %53 : vector<8x256xf32>
      %55 = vector.extract_strided_slice %54 {offsets = [0, 0], sizes = [8, 128], strides = [1, 1]} : vector<8x256xf32> to vector<8x128xf32>
      %56 = vector.extract_strided_slice %54 {offsets = [0, 128], sizes = [8, 128], strides = [1, 1]} : vector<8x256xf32> to vector<8x128xf32>
      %57 = vector.extract_strided_slice %43 {offsets = [0, 256], sizes = [8, 128], strides = [1, 1]} : vector<8x384xf32> to vector<8x128xf32>
      %58 = arith.mulf %56, %41 : vector<8x128xf32>
      %59 = arith.truncf %58 : vector<8x128xf32> to vector<8x128xbf16>
      %c1_54 = arith.constant 1 : index
      %c0_55 = arith.constant 0 : index
      %c0_56 = arith.constant 0 : index
      %60 = vector.load %arg7[%c1_54, %c0_55, %c0_56] : memref<2x128x128xbf16, #tpu.memory_space<vmem>>, vector<1x128x128xbf16>
      %61 = vector.shape_cast %60 : vector<1x128x128xbf16> to vector<128x128xbf16>
      %cst_57 = arith.constant dense<0.000000e+00> : vector<8x128xf32>
      %62 = tpu.matmul %59, %61, %cst_57 {dimension_numbers = #tpu.dot_dimension_numbers<[1], [0], [0], [1], [0, 0, 1, 1], [], []>} : vector<8x128xbf16>, vector<128x128xbf16>, vector<8x128xf32> -> vector<8x128xf32>
      %63 = arith.addf %57, %62 : vector<8x128xf32>
      %64 = math.tanh %63 : vector<8x128xf32>
      %65 = arith.mulf %41, %55 : vector<8x128xf32>
      %cst_58 = arith.constant 1.000000e+00 : f32
      %66 = vector.broadcast %cst_58 : f32 to vector<8x128xf32>
      %67 = arith.subf %66, %55 : vector<8x128xf32>
      %68 = arith.mulf %67, %64 : vector<8x128xf32>
      %69 = arith.addf %65, %68 : vector<8x128xf32>
      %c1_59 = arith.constant 1 : index
      %c0_60 = arith.constant 0 : index
      %c0_61 = arith.constant 0 : index
      %70 = vector.load %arg13[%c1_59, %c0_60, %c0_61] : memref<2x8x128xf32, #tpu.memory_space<vmem>>, vector<1x8x128xf32>
      %71 = vector.shape_cast %70 : vector<1x8x128xf32> to vector<8x128xf32>
      %72 = vector.shape_cast %69 : vector<8x128xf32> to vector<1x8x128xf32>
      tpu.vector_store %arg13[%c1_59, %c0_60, %c0_61], %72 {strides = array<i32>} : memref<2x8x128xf32, #tpu.memory_space<vmem>>, vector<1x8x128xf32>,
      %73 = arith.index_cast %39 : i32 to index
      %c0_62 = arith.constant 0 : index
      %74 = vector.load %arg15[%73, %c0_62] : memref<64x128xf32, #tpu.memory_space<vmem>>, vector<8x128xf32>
      tpu.vector_store %arg15[%73, %c0_62], %69 {strides = array<i32>} : memref<64x128xf32, #tpu.memory_space<vmem>>, vector<8x128xf32>,
    }
    %c8_i32_25 = arith.constant 8 : i32
    %c0_26 = arith.constant 0 : index
    %c0_27 = arith.constant 0 : index
    %25 = vector.load %arg15[%c0_26, %c0_27] : memref<64x128xf32, #tpu.memory_space<vmem>>, vector<64x128xf32>
    %26 = arith.truncf %25 : vector<64x128xf32> to vector<64x128xbf16>
    %c0_28 = arith.constant 0 : index
    %c0_29 = arith.constant 0 : index
    %27 = vector.load %arg9[%c0_28, %c0_29] : memref<128x128xbf16, #tpu.memory_space<vmem>>, vector<128x128xbf16>
    %cst_30 = arith.constant dense<0.000000e+00> : vector<64x128xf32>
    %28 = tpu.matmul %26, %27, %cst_30 {dimension_numbers = #tpu.dot_dimension_numbers<[1], [0], [0], [1], [0, 0, 1, 1], [], []>} : vector<64x128xbf16>, vector<128x128xbf16>, vector<64x128xf32> -> vector<64x128xf32>
    %c0_31 = arith.constant 0 : index
    %c0_32 = arith.constant 0 : index
    %29 = vector.load %arg10[%c0_31, %c0_32] : memref<1x128xf32, #tpu.memory_space<vmem>>, vector<1x128xf32>
    %30 = vector.broadcast %29 : vector<1x128xf32> to vector<64x128xf32>
    %31 = arith.addf %28, %30 : vector<64x128xf32>
    %32 = vector.shape_cast %31 : vector<64x128xf32> to vector<8x8x128xf32>
    %c0_33 = arith.constant 0 : index
    %c0_34 = arith.constant 0 : index
    %c0_35 = arith.constant 0 : index
    %33 = vector.load %arg11[%c0_33, %c0_34, %c0_35] : memref<8x8x128xf32, #tpu.memory_space<vmem>>, vector<8x8x128xf32>
    tpu.vector_store %arg11[%c0_33, %c0_34, %c0_35], %32 {strides = array<i32>} : memref<8x8x128xf32, #tpu.memory_space<vmem>>, vector<8x8x128xf32>,
    %c0_36 = arith.constant 0 : index
    %c0_37 = arith.constant 0 : index
    %c0_38 = arith.constant 0 : index
    %34 = vector.load %arg13[%c0_36, %c0_37, %c0_38] : memref<2x8x128xf32, #tpu.memory_space<vmem>>, vector<2x8x128xf32>
    %c0_39 = arith.constant 0 : index
    %c0_40 = arith.constant 0 : index
    %c0_41 = arith.constant 0 : index
    %35 = vector.load %arg12[%c0_39, %c0_40, %c0_41] : memref<2x8x128xf32, #tpu.memory_space<vmem>>, vector<2x8x128xf32>
    tpu.vector_store %arg12[%c0_39, %c0_40, %c0_41], %34 {strides = array<i32>} : memref<2x8x128xf32, #tpu.memory_space<vmem>>, vector<2x8x128xf32>,
    return
  }
  func.func @transform_0(%arg0: i32, %arg1: i32) -> (i32, i32, i32) {
    %c0_i32 = arith.constant 0 : i32
    %c0_i32_0 = arith.constant 0 : i32
    return %arg1, %arg0, %c0_i32 : i32, i32, i32
  }
  func.func @transform_1(%arg0: i32, %arg1: i32) -> (i32, i32, i32) {
    %c0_i32 = arith.constant 0 : i32
    %c0_i32_0 = arith.constant 0 : i32
    %c0_i32_1 = arith.constant 0 : i32
    return %c0_i32, %arg0, %c0_i32_0 : i32, i32, i32
  }
  func.func @transform_2(%arg0: i32, %arg1: i32) -> (i32, i32) {
    %c0_i32 = arith.constant 0 : i32
    %c0_i32_0 = arith.constant 0 : i32
    %c0_i32_1 = arith.constant 0 : i32
    return %c0_i32, %c0_i32_0 : i32, i32
  }
  func.func @transform_3(%arg0: i32, %arg1: i32) -> (i32, i32, i32) {
    %c0_i32 = arith.constant 0 : i32
    %c0_i32_0 = arith.constant 0 : i32
    %c0_i32_1 = arith.constant 0 : i32
    %c0_i32_2 = arith.constant 0 : i32
    return %c0_i32, %c0_i32_0, %c0_i32_1 : i32, i32, i32
  }
  func.func @transform_4(%arg0: i32, %arg1: i32) -> (i32, i32, i32) {
    %c0_i32 = arith.constant 0 : i32
    %c0_i32_0 = arith.constant 0 : i32
    %c0_i32_1 = arith.constant 0 : i32
    %c0_i32_2 = arith.constant 0 : i32
    return %c0_i32, %c0_i32_0, %c0_i32_1 : i32, i32, i32
  }
  func.func @transform_5(%arg0: i32, %arg1: i32) -> (i32, i32, i32) {
    %c0_i32 = arith.constant 0 : i32
    %c0_i32_0 = arith.constant 0 : i32
    %c0_i32_1 = arith.constant 0 : i32
    %c0_i32_2 = arith.constant 0 : i32
    return %c0_i32, %c0_i32_0, %c0_i32_1 : i32, i32, i32
  }
  func.func @transform_6(%arg0: i32, %arg1: i32) -> (i32, i32, i32) {
    %c0_i32 = arith.constant 0 : i32
    %c0_i32_0 = arith.constant 0 : i32
    %c0_i32_1 = arith.constant 0 : i32
    %c0_i32_2 = arith.constant 0 : i32
    return %c0_i32, %c0_i32_0, %c0_i32_1 : i32, i32, i32
  }
  func.func @transform_7(%arg0: i32, %arg1: i32) -> (i32, i32) {
    %c0_i32 = arith.constant 0 : i32
    %c0_i32_0 = arith.constant 0 : i32
    %c0_i32_1 = arith.constant 0 : i32
    return %c0_i32, %c0_i32_0 : i32, i32
  }
  func.func @transform_8(%arg0: i32, %arg1: i32) -> (i32, i32) {
    %c0_i32 = arith.constant 0 : i32
    %c0_i32_0 = arith.constant 0 : i32
    %c0_i32_1 = arith.constant 0 : i32
    return %c0_i32, %c0_i32_0 : i32, i32
  }
  func.func @transform_9(%arg0: i32, %arg1: i32) -> (i32, i32, i32) {
    %c0_i32 = arith.constant 0 : i32
    %c0_i32_0 = arith.constant 0 : i32
    return %arg1, %arg0, %c0_i32 : i32, i32, i32
  }
  func.func @transform_10(%arg0: i32, %arg1: i32) -> (i32, i32, i32) {
    %c0_i32 = arith.constant 0 : i32
    %c0_i32_0 = arith.constant 0 : i32
    %c0_i32_1 = arith.constant 0 : i32
    return %c0_i32, %arg0, %c0_i32_0 : i32, i32, i32
  }
}

</mosaic_0001>

<llo_original>
// kernel: tpu_custom_call.1
$region0: #{tpu_custom_call.1}
  #allocation0 [shape = 'u32[]', space=smem, size = 0x4, offset = 0x4, fixed_abs, tag = 'smem constant byte address 0x4 - core index']
  #allocation1 [shape = 'u32[144,128]{1,0:T(1,128)}', space=vmem, size = 0x12000, scoped, tag = 'internal scratch']
  #allocation2 [shape = 'f32[2,8,128]{2,1,0:T(8,128)}', space=vmem, size = 0x2000, scoped, tag = 'scratch operand']
  #allocation3 [shape = 'f32[64,384]{1,0:T(8,128)}', space=vmem, size = 0x18000, scoped, tag = 'scratch operand']
  #allocation4 [shape = 'f32[64,128]{1,0:T(8,128)}', space=vmem, size = 0x8000, scoped, tag = 'scratch operand']
  %s0 = inlined_call_operand.hbm [shape: f32[8,8,128], index: 0, kind: input, shape index: {}]
  %s1 = inlined_call_operand.hbm [shape: f32[2,8,128], index: 1, kind: input, shape index: {}]
  %s2 = inlined_call_operand.hbm [shape: bf16[128,384], index: 2, kind: input, shape index: {}]
  %s3 = inlined_call_operand.hbm [shape: bf16[2,128,384], index: 3, kind: input, shape index: {}]
  %s4 = inlined_call_operand.hbm [shape: bf16[2,128,256], index: 4, kind: input, shape index: {}]
  %s5 = inlined_call_operand.hbm [shape: bf16[2,128,128], index: 5, kind: input, shape index: {}]
  %s6 = inlined_call_operand.vmem [shape: f32[2,1,384], index: 6, kind: input, shape index: {}]
  %s7 = inlined_call_operand.hbm [shape: bf16[128,128], index: 7, kind: input, shape index: {}]
  %s8 = inlined_call_operand.vmem [shape: f32[1,128], index: 8, kind: input, shape index: {}]
  %s9 = inlined_call_operand.hbm [shape: f32[8,8,128], index: 9, kind: output, shape index: {0}]
  %s10 = inlined_call_operand.hbm [shape: f32[2,8,128], index: 10, kind: output, shape index: {1}]
  %11 = xla_tuple %s9, %s10
  %s12 = sld [smem:[#allocation0]]
  $region100: #{tpu_custom_call.1} parent=0
    _
  %s14 = ssub.s32 1, %s12
  %s15 = scalar_select 0, %s14, %s12
  $region1: #{tpu_custom_call.1} parent=0
    #allocation5 [shape = 'u8[32768]{0}', space=vmem, size = 0x8000, scoped, tag = 'input window, operand 0, single buffered']
    #allocation6 [shape = 's32[1]{0}', space=sflag, size = 0x4, scoped, tag = 'scoped memory for tpu_custom_call.1']
    #allocation7 [shape = 's32[1]{0}', space=sflag, size = 0x4, scoped, tag = 'scoped memory for tpu_custom_call.1']
    #allocation8 [shape = 'u8[8192]{0}', space=vmem, size = 0x2000, scoped, tag = 'input window, operand 1, single buffered']
    #allocation9 [shape = 's32[1]{0}', space=sflag, size = 0x4, scoped, tag = 'scoped memory for tpu_custom_call.1']
    #allocation10 [shape = 'u8[98304]{0}', space=vmem, size = 0x18000, scoped, tag = 'input window, operand 2, single buffered']
    #allocation11 [shape = 'u8[196608]{0}', space=vmem, size = 0x30000, scoped, tag = 'input window, operand 3, single buffered']
    #allocation12 [shape = 's32[1]{0}', space=sflag, size = 0x4, scoped, tag = 'scoped memory for tpu_custom_call.1']
    #allocation13 [shape = 'u8[131072]{0}', space=vmem, size = 0x20000, scoped, tag = 'input window, operand 4, single buffered']
    #allocation14 [shape = 'u8[65536]{0}', space=vmem, size = 0x10000, scoped, tag = 'input window, operand 5, single buffered']
    #allocation15 [shape = 's32[1]{0}', space=sflag, size = 0x4, scoped, tag = 'scoped memory for tpu_custom_call.1']
    #allocation16 [shape = 'u8[32768]{0}', space=vmem, size = 0x8000, scoped, tag = 'input window, operand 7, single buffered']
    #allocation17 [shape = 'u8[32768]{0}', space=vmem, size = 0x8000, scoped, tag = 'output window, operand 0, single buffered']
    #allocation18 [shape = 'u8[8192]{0}', space=vmem, size = 0x2000, scoped, tag = 'output window, operand 1, single buffered']
    #allocation19 [shape = 's32[1]{0}', space=sflag, size = 0x4, scoped, tag = 'scoped memory for tpu_custom_call.1']
    %16 = vsyncpa [#allocation6], 0
    %17 = vsyncpa [#allocation9], 0
    %18 = vsyncpa [#allocation12], 0
    %19 = vsyncpa [#allocation15], 0
    %20 = vsyncpa [#allocation7], 0
    %21 = vsyncpa [#allocation19], 0
    // Predicated region
    $region2: #{tpu_custom_call.1} parent=1 // pred_check
      _
    $region3: #{tpu_custom_call.1} parent=1 // pred_check_branch
      %23 = sbr.rel (0) target = $region5
    $region4: #{tpu_custom_call.1} parent=1 // pred_region
      %s25 = ssub.s32 1024, 1024
      %26 = vsyncadd [#allocation6], %s25
      %s27 = sshll.u32 [#allocation5], 4
      %s28 = int_to_ptr.vmem [resolvable:$true] %s27
      %33 = dma.hbm_to_vmem [thread:$0]  %s0, 1024, %s28, [#allocation6], 128, 128, 8
    $region5: #{tpu_custom_call.1} parent=1 // pred_fallthru
      _
    // Predicated region
    $region6: #{tpu_custom_call.1} parent=1 // pred_check
      _
    $region7: #{tpu_custom_call.1} parent=1 // pred_check_branch
      %35 = sbr.rel (0) target = $region9
    $region8: #{tpu_custom_call.1} parent=1 // pred_region
      %s37 = ssub.s32 256, 256
      %38 = vsyncadd [#allocation9], %s37
      %s39 = sshll.u32 [#allocation8], 4
      %s40 = int_to_ptr.vmem [resolvable:$true] %s39
      %45 = dma.hbm_to_vmem [thread:$0]  %s1, 256, %s40, [#allocation9], 128, 128, 8
    $region9: #{tpu_custom_call.1} parent=1 // pred_fallthru
      _
    // Predicated region
    $region10: #{tpu_custom_call.1} parent=1 // pred_check
      _
    $region11: #{tpu_custom_call.1} parent=1 // pred_check_branch
      %47 = sbr.rel (0) target = $region13
    $region12: #{tpu_custom_call.1} parent=1 // pred_region
      %s49 = ssub.s32 3072, 3072
      %50 = vsyncadd [#allocation9], %s49
      %s51 = sshll.u32 [#allocation10], 4
      %s52 = int_to_ptr.vmem [resolvable:$true] %s51
      %57 = dma.hbm_to_vmem [thread:$0]  %s2, 3072, %s52, [#allocation9], 192, 192, 12
    $region13: #{tpu_custom_call.1} parent=1 // pred_fallthru
      _
    // Predicated region
    $region14: #{tpu_custom_call.1} parent=1 // pred_check
      _
    $region15: #{tpu_custom_call.1} parent=1 // pred_check_branch
      %59 = sbr.rel (0) target = $region17
    $region16: #{tpu_custom_call.1} parent=1 // pred_region
      %s61 = ssub.s32 6144, 6144
      %62 = vsyncadd [#allocation12], %s61
      %s63 = sshll.u32 [#allocation11], 4
      %s64 = int_to_ptr.vmem [resolvable:$true] %s63
      %69 = dma.hbm_to_vmem [thread:$0]  %s3, 6144, %s64, [#allocation12], 192, 192, 12
    $region17: #{tpu_custom_call.1} parent=1 // pred_fallthru
      _
    // Predicated region
    $region18: #{tpu_custom_call.1} parent=1 // pred_check
      _
    $region19: #{tpu_custom_call.1} parent=1 // pred_check_branch
      %71 = sbr.rel (0) target = $region21
    $region20: #{tpu_custom_call.1} parent=1 // pred_region
      %s73 = ssub.s32 4096, 4096
      %74 = vsyncadd [#allocation12], %s73
      %s75 = sshll.u32 [#allocation13], 4
      %s76 = int_to_ptr.vmem [resolvable:$true] %s75
      %81 = dma.hbm_to_vmem [thread:$0]  %s4, 4096, %s76, [#allocation12], 128, 128, 8
    $region21: #{tpu_custom_call.1} parent=1 // pred_fallthru
      _
    // Predicated region
    $region22: #{tpu_custom_call.1} parent=1 // pred_check
      _
    $region23: #{tpu_custom_call.1} parent=1 // pred_check_branch
      %83 = sbr.rel (0) target = $region25
    $region24: #{tpu_custom_call.1} parent=1 // pred_region
      %s85 = ssub.s32 2048, 2048
      %86 = vsyncadd [#allocation15], %s85
      %s87 = sshll.u32 [#allocation14], 4
      %s88 = int_to_ptr.vmem [resolvable:$true] %s87
      %93 = dma.hbm_to_vmem [thread:$0]  %s5, 2048, %s88, [#allocation15], 64, 64, 4
    $region25: #{tpu_custom_call.1} parent=1 // pred_fallthru
      _
    // Predicated region
    $region26: #{tpu_custom_call.1} parent=1 // pred_check
      _
    $region27: #{tpu_custom_call.1} parent=1 // pred_check_branch
      %95 = sbr.rel (0) target = $region29
    $region28: #{tpu_custom_call.1} parent=1 // pred_region
      _
    $region29: #{tpu_custom_call.1} parent=1 // pred_fallthru
      _
    // Predicated region
    $region30: #{tpu_custom_call.1} parent=1 // pred_check
      _
    $region31: #{tpu_custom_call.1} parent=1 // pred_check_branch
      %97 = sbr.rel (0) target = $region33
    $region32: #{tpu_custom_call.1} parent=1 // pred_region
      %s99 = ssub.s32 1024, 1024
      %100 = vsyncadd [#allocation15], %s99
      %s101 = sshll.u32 [#allocation16], 4
      %s102 = int_to_ptr.vmem [resolvable:$true] %s101
      %107 = dma.hbm_to_vmem [thread:$0]  %s7, 1024, %s102, [#allocation15], 64, 64, 4
    $region33: #{tpu_custom_call.1} parent=1 // pred_fallthru
      _
    // Predicated region
    $region34: #{tpu_custom_call.1} parent=1 // pred_check
      _
    $region35: #{tpu_custom_call.1} parent=1 // pred_check_branch
      %109 = sbr.rel (0) target = $region37
    $region36: #{tpu_custom_call.1} parent=1 // pred_region
      _
    $region37: #{tpu_custom_call.1} parent=1 // pred_fallthru
      _
    // Predicated region
    $region38: #{tpu_custom_call.1} parent=1 // pred_check
      _
    $region39: #{tpu_custom_call.1} parent=1 // pred_check_branch
      %111 = sbr.rel (0) target = $region41
    $region40: #{tpu_custom_call.1} parent=1 // pred_region
      %112 = dma.done [#allocation6], 1024
    $region41: #{tpu_custom_call.1} parent=1 // pred_fallthru
      _
    // Predicated region
    $region42: #{tpu_custom_call.1} parent=1 // pred_check
      _
    $region43: #{tpu_custom_call.1} parent=1 // pred_check_branch
      %114 = sbr.rel (0) target = $region45
    $region44: #{tpu_custom_call.1} parent=1 // pred_region
      %115 = dma.done [#allocation9], 256
    $region45: #{tpu_custom_call.1} parent=1 // pred_fallthru
      _
    // Predicated region
    $region46: #{tpu_custom_call.1} parent=1 // pred_check
      _
    $region47: #{tpu_custom_call.1} parent=1 // pred_check_branch
      %117 = sbr.rel (0) target = $region49
    $region48: #{tpu_custom_call.1} parent=1 // pred_region
      %118 = dma.done [#allocation9], 3072
    $region49: #{tpu_custom_call.1} parent=1 // pred_fallthru
      _
    // Predicated region
    $region50: #{tpu_custom_call.1} parent=1 // pred_check
      _
    $region51: #{tpu_custom_call.1} parent=1 // pred_check_branch
      %120 = sbr.rel (0) target = $region53
    $region52: #{tpu_custom_call.1} parent=1 // pred_region
      %121 = dma.done [#allocation12], 6144
    $region53: #{tpu_custom_call.1} parent=1 // pred_fallthru
      _
    // Predicated region
    $region54: #{tpu_custom_call.1} parent=1 // pred_check
      _
    $region55: #{tpu_custom_call.1} parent=1 // pred_check_branch
      %123 = sbr.rel (0) target = $region57
    $region56: #{tpu_custom_call.1} parent=1 // pred_region
      %124 = dma.done [#allocation12], 4096
    $region57: #{tpu_custom_call.1} parent=1 // pred_fallthru
      _
    // Predicated region
    $region58: #{tpu_custom_call.1} parent=1 // pred_check
      _
    $region59: #{tpu_custom_call.1} parent=1 // pred_check_branch
      %126 = sbr.rel (0) target = $region61
    $region60: #{tpu_custom_call.1} parent=1 // pred_region
      %127 = dma.done [#allocation15], 2048
    $region61: #{tpu_custom_call.1} parent=1 // pred_fallthru
      _
    // Predicated region
    $region62: #{tpu_custom_call.1} parent=1 // pred_check
      _
    $region63: #{tpu_custom_call.1} parent=1 // pred_check_branch
      %129 = sbr.rel (0) target = $region65
    $region64: #{tpu_custom_call.1} parent=1 // pred_region
      %130 = dma.done [#allocation15], 1024
    $region65: #{tpu_custom_call.1} parent=1 // pred_fallthru
      _
    %p132 = scmp.eq.s32.totalorder 0, 0
    // Predicated region
    $region66: #{tpu_custom_call.1} parent=1 // pred_check
      %p133 = pneg %p132
    $region67: #{tpu_custom_call.1} parent=1 // pred_check_branch
      %135 = sbr.rel (%p133) target = $region69
    $region68: #{tpu_custom_call.1} parent=1 // pred_region
      %v136 = vld [vmem:[#allocation8] sm:$0xff]
      %v137 = vld [vmem:[#allocation8 + $0x8] sm:$0xff]
      %138 = vst [vmem:[#allocation2] sm:$0xff] %v136
      %139 = vst [vmem:[#allocation2 + $0x8] sm:$0xff] %v137
    $region69: #{tpu_custom_call.1} parent=1 // pred_fallthru
      _
    %v140 = vld [vmem:[#allocation5] sm:$0xff]
    %v141 = vld [vmem:[#allocation5 + $0x8] sm:$0xff]
    %v142 = vld [vmem:[#allocation5 + $0x10] sm:$0xff]
    %v143 = vld [vmem:[#allocation5 + $0x18] sm:$0xff]
    %v144 = vld [vmem:[#allocation5 + $0x20] sm:$0xff]
    %v145 = vld [vmem:[#allocation5 + $0x28] sm:$0xff]
    %v146 = vld [vmem:[#allocation5 + $0x30] sm:$0xff]
    %v147 = vld [vmem:[#allocation5 + $0x38] sm:$0xff]
    %v148 = vpack.c.bf16 %v141, %v140
    %v149 = vpack.c.bf16 %v143, %v142
    %v150 = vpack.c.bf16 %v145, %v144
    %v151 = vpack.c.bf16 %v147, %v146
    %v152 = vld [vmem:[#allocation10] sm:$0xff]
    %v153 = vld [vmem:[#allocation10 + $0x8] sm:$0xf]
    %v154 = vld [vmem:[#allocation10 + $0xc] sm:$0xff]
    %v155 = vld [vmem:[#allocation10 + $0x14] sm:$0xf]
    %v156 = vld [vmem:[#allocation10 + $0x18] sm:$0xff]
    %v157 = vld [vmem:[#allocation10 + $0x20] sm:$0xf]
    %v158 = vld [vmem:[#allocation10 + $0x24] sm:$0xff]
    %v159 = vld [vmem:[#allocation10 + $0x2c] sm:$0xf]
    %v160 = vld [vmem:[#allocation10 + $0x30] sm:$0xff]
    %v161 = vld [vmem:[#allocation10 + $0x38] sm:$0xf]
    %v162 = vld [vmem:[#allocation10 + $0x3c] sm:$0xff]
    %v163 = vld [vmem:[#allocation10 + $0x44] sm:$0xf]
    %v164 = vld [vmem:[#allocation10 + $0x48] sm:$0xff]
    %v165 = vld [vmem:[#allocation10 + $0x50] sm:$0xf]
    %v166 = vld [vmem:[#allocation10 + $0x54] sm:$0xff]
    %v167 = vld [vmem:[#allocation10 + $0x5c] sm:$0xf]
    %v168 = vld [vmem:[#allocation10 + $0x60] sm:$0xff]
    %v169 = vld [vmem:[#allocation10 + $0x68] sm:$0xf]
    %v170 = vld [vmem:[#allocation10 + $0x6c] sm:$0xff]
    %v171 = vld [vmem:[#allocation10 + $0x74] sm:$0xf]
    %v172 = vld [vmem:[#allocation10 + $0x78] sm:$0xff]
    %v173 = vld [vmem:[#allocation10 + $0x80] sm:$0xf]
    %v174 = vld [vmem:[#allocation10 + $0x84] sm:$0xff]
    %v175 = vld [vmem:[#allocation10 + $0x8c] sm:$0xf]
    %v176 = vld [vmem:[#allocation10 + $0x90] sm:$0xff]
    %v177 = vld [vmem:[#allocation10 + $0x98] sm:$0xf]
    %v178 = vld [vmem:[#allocation10 + $0x9c] sm:$0xff]
    %v179 = vld [vmem:[#allocation10 + $0xa4] sm:$0xf]
    %v180 = vld [vmem:[#allocation10 + $0xa8] sm:$0xff]
    %v181 = vld [vmem:[#allocation10 + $0xb0] sm:$0xf]
    %v182 = vld [vmem:[#allocation10 + $0xb4] sm:$0xff]
    %v183 = vld [vmem:[#allocation10 + $0xbc] sm:$0xf]
    %v184 = vld [vmem:[%s6] sm:$0x7]
    %v186 = vlaneseq
    %v187 = vshrl.u32 %v186, 7
    %v188 = vsub.s32 0, %v187
    %v189 = vrot.slane %v184, %v188
    %v190 = vlaneseq
    %v191 = vshrl.u32 %v190, 7
    %v192 = vsub.s32 1, %v191
    %v193 = vrot.slane %v184, %v192
    %v194 = vlaneseq
    %v195 = vshrl.u32 %v194, 7
    %v196 = vsub.s32 2, %v195
    %v197 = vrot.slane %v184, %v196
    %v233 = vunpack.c.l.b16 %v152
    %v234 = vunpack.c.h.b16 %v152
    %v235 = vunpack.c.l.b16 %v153
    %v236 = vunpack.c.l.b16 %v154
    %v237 = vunpack.c.h.b16 %v154
    %v238 = vunpack.c.l.b16 %v155
    %v239 = vunpack.c.l.b16 %v156
    %v240 = vunpack.c.h.b16 %v156
    %v241 = vunpack.c.l.b16 %v157
    %v242 = vunpack.c.l.b16 %v158
    %v243 = vunpack.c.h.b16 %v158
    %v244 = vunpack.c.l.b16 %v159
    %v245 = vunpack.c.l.b16 %v160
    %v246 = vunpack.c.h.b16 %v160
    %v247 = vunpack.c.l.b16 %v161
    %v248 = vunpack.c.l.b16 %v162
    %v249 = vunpack.c.h.b16 %v162
    %v250 = vunpack.c.l.b16 %v163
    %v251 = vunpack.c.l.b16 %v164
    %v252 = vunpack.c.h.b16 %v164
    %v253 = vunpack.c.l.b16 %v165
    %v254 = vunpack.c.l.b16 %v166
    %v255 = vunpack.c.h.b16 %v166
    %v256 = vunpack.c.l.b16 %v167
    %v257 = vunpack.c.l.b16 %v168
    %v258 = vunpack.c.h.b16 %v168
    %v259 = vunpack.c.l.b16 %v169
    %v260 = vunpack.c.l.b16 %v170
    %v261 = vunpack.c.h.b16 %v170
    %v262 = vunpack.c.l.b16 %v171
    %v263 = vunpack.c.l.b16 %v172
    %v264 = vunpack.c.h.b16 %v172
    %v265 = vunpack.c.l.b16 %v173
    %v266 = vunpack.c.l.b16 %v174
    %v267 = vunpack.c.h.b16 %v174
    %v268 = vunpack.c.l.b16 %v175
    %v269 = vunpack.c.l.b16 %v176
    %v270 = vunpack.c.h.b16 %v176
    %v271 = vunpack.c.l.b16 %v177
    %v272 = vunpack.c.l.b16 %v178
    %v273 = vunpack.c.h.b16 %v178
    %v274 = vunpack.c.l.b16 %v179
    %v275 = vunpack.c.l.b16 %v180
    %v276 = vunpack.c.h.b16 %v180
    %v277 = vunpack.c.l.b16 %v181
    %v278 = vunpack.c.l.b16 %v182
    %v279 = vunpack.c.h.b16 %v182
    %v280 = vunpack.c.l.b16 %v183
    %v281 = vpack.c.b16 %v236, %v233
    %v282 = vpack.c.b16 %v237, %v234
    %v283 = vpack.c.b16 %v238, %v235
    %v284 = vpack.c.b16 %v242, %v239
    %v285 = vpack.c.b16 %v243, %v240
    %v286 = vpack.c.b16 %v244, %v241
    %v287 = vpack.c.b16 %v248, %v245
    %v288 = vpack.c.b16 %v249, %v246
    %v289 = vpack.c.b16 %v250, %v247
    %v290 = vpack.c.b16 %v254, %v251
    %v291 = vpack.c.b16 %v255, %v252
    %v292 = vpack.c.b16 %v256, %v253
    %v293 = vpack.c.b16 %v260, %v257
    %v294 = vpack.c.b16 %v261, %v258
    %v295 = vpack.c.b16 %v262, %v259
    %v296 = vpack.c.b16 %v266, %v263
    %v297 = vpack.c.b16 %v267, %v264
    %v298 = vpack.c.b16 %v268, %v265
    %v299 = vpack.c.b16 %v272, %v269
    %v300 = vpack.c.b16 %v273, %v270
    %v301 = vpack.c.b16 %v274, %v271
    %v302 = vpack.c.b16 %v278, %v275
    %v303 = vpack.c.b16 %v279, %v276
    %v304 = vpack.c.b16 %v280, %v277
    %329 = vmatprep.subr.bf16.mxu0 %v282
    %330 = vmatpush1.bf16.msra.mxu0 %v281
    %331 = vmatprep.subr.bf16.mxu0 %v285
    %332 = vmatpush1.bf16.msra.mxu0 %v284
    %333 = vmatprep.subr.bf16.mxu0 %v288
    %334 = vmatpush1.bf16.msra.mxu0 %v287
    %335 = vmatprep.subr.bf16.mxu0 %v291
    %336 = vmatpush1.bf16.msra.mxu0 %v290
    %337 = vmatprep.subr.bf16.mxu0 %v294
    %338 = vmatpush1.bf16.msra.mxu0 %v293
    %339 = vmatprep.subr.bf16.mxu0 %v297
    %340 = vmatpush1.bf16.msra.mxu0 %v296
    %341 = vmatprep.subr.bf16.mxu0 %v300
    %342 = vmatpush1.bf16.msra.mxu0 %v299
    %343 = vmatprep.subr.bf16.mxu0 %v303
    %344 = vmatpush1.bf16.msra.mxu0 %v302
    %345 = vmatprep.subr.bf16.mxu0 0
    %346 = vmatpush1.bf16.msra.mxu0 0
    %347 = vmatprep.subr.bf16.mxu0 0
    %348 = vmatpush1.bf16.msra.mxu0 0
    %349 = vmatprep.subr.bf16.mxu0 0
    %350 = vmatpush1.bf16.msra.mxu0 0
    %351 = vmatprep.subr.bf16.mxu0 0
    %352 = vmatpush1.bf16.msra.mxu0 0
    %353 = vmatprep.subr.bf16.mxu0 0
    %354 = vmatpush1.bf16.msra.mxu0 0
    %355 = vmatprep.subr.bf16.mxu0 0
    %356 = vmatpush1.bf16.msra.mxu0 0
    %357 = vmatprep.subr.bf16.mxu0 0
    %358 = vmatpush1.bf16.msra.mxu0 0
    %359 = vmatprep.subr.bf16.mxu0 0
    %360 = vmatpush1.bf16.msra.mxu0 0
    %361 = vmatprep.mubr.bf16.mxu0 0
    %362 = vmatmul.mubr.bf16.gmra.mrb[0].mxu0 %v148
    %v363 = vpop.f32.mrb[0].mxu0
    %v364 = vadd.f32 %v189, %v363
    %v365 = vpop.f32.mrb[0].mxu0
    %v366 = vadd.f32 %v193, %v365
    %v367 = vpop.f32.mrb[0].mxu0
    %v368 = vadd.f32 %v189, %v367
    %v369 = vpop.f32.mrb[0].mxu0
    %v370 = vadd.f32 %v193, %v369
    %371 = vmatprep.mubr.bf16.mxu0 0
    %372 = vmatmul.mubr.bf16.gmra.mrb[0].mxu0 %v149
    %v373 = vpop.f32.mrb[0].mxu0
    %v374 = vadd.f32 %v189, %v373
    %v375 = vpop.f32.mrb[0].mxu0
    %v376 = vadd.f32 %v193, %v375
    %v377 = vpop.f32.mrb[0].mxu0
    %v378 = vadd.f32 %v189, %v377
    %v379 = vpop.f32.mrb[0].mxu0
    %v380 = vadd.f32 %v193, %v379
    %381 = vmatprep.mubr.bf16.mxu0 0
    %382 = vmatmul.mubr.bf16.gmra.mrb[0].mxu0 %v150
    %v383 = vpop.f32.mrb[0].mxu0
    %v384 = vadd.f32 %v189, %v383
    %v385 = vpop.f32.mrb[0].mxu0
    %v386 = vadd.f32 %v193, %v385
    %v387 = vpop.f32.mrb[0].mxu0
    %v388 = vadd.f32 %v189, %v387
    %v389 = vpop.f32.mrb[0].mxu0
    %v390 = vadd.f32 %v193, %v389
    %391 = vmatprep.mubr.bf16.mxu0 0
    %392 = vmatmul.mubr.bf16.gmra.mrb[0].mxu0 %v151
    %v393 = vpop.f32.mrb[0].mxu0
    %v394 = vadd.f32 %v189, %v393
    %v395 = vpop.f32.mrb[0].mxu0
    %v396 = vadd.f32 %v193, %v395
    %v397 = vpop.f32.mrb[0].mxu0
    %v398 = vadd.f32 %v189, %v397
    %v399 = vpop.f32.mrb[0].mxu0
    %v400 = vadd.f32 %v193, %v399
    %401 = vdwg.mxu0
    %402 = vmatprep.subr.bf16.mxu0 0
    %403 = vmatpush1.bf16.msra.mxu0 %v283
    %404 = vmatprep.subr.bf16.mxu0 0
    %405 = vmatpush1.bf16.msra.mxu0 %v286
    %406 = vmatprep.subr.bf16.mxu0 0
    %407 = vmatpush1.bf16.msra.mxu0 %v289
    %408 = vmatprep.subr.bf16.mxu0 0
    %409 = vmatpush1.bf16.msra.mxu0 %v292
    %410 = vmatprep.subr.bf16.mxu0 0
    %411 = vmatpush1.bf16.msra.mxu0 %v295
    %412 = vmatprep.subr.bf16.mxu0 0
    %413 = vmatpush1.bf16.msra.mxu0 %v298
    %414 = vmatprep.subr.bf16.mxu0 0
    %415 = vmatpush1.bf16.msra.mxu0 %v301
    %416 = vmatprep.subr.bf16.mxu0 0
    %417 = vmatpush1.bf16.msra.mxu0 %v304
    %418 = vmatprep.subr.bf16.mxu0 0
    %419 = vmatpush1.bf16.msra.mxu0 0
    %420 = vmatprep.subr.bf16.mxu0 0
    %421 = vmatpush1.bf16.msra.mxu0 0
    %422 = vmatprep.subr.bf16.mxu0 0
    %423 = vmatpush1.bf16.msra.mxu0 0
    %424 = vmatprep.subr.bf16.mxu0 0
    %425 = vmatpush1.bf16.msra.mxu0 0
    %426 = vmatprep.subr.bf16.mxu0 0
    %427 = vmatpush1.bf16.msra.mxu0 0
    %428 = vmatprep.subr.bf16.mxu0 0
    %429 = vmatpush1.bf16.msra.mxu0 0
    %430 = vmatprep.subr.bf16.mxu0 0
    %431 = vmatpush1.bf16.msra.mxu0 0
    %432 = vmatprep.subr.bf16.mxu0 0
    %433 = vmatpush1.bf16.msra.mxu0 0
    %434 = vmatprep.mubr.bf16.mxu0 0
    %435 = vmatmul.mubr.bf16.gmra.mrb[0].mxu0 %v148
    %v436 = vpop.f32.mrb[0].mxu0
    %v437 = vadd.f32 %v197, %v436
    %v438 = vpop.f32.mrb[0].mxu0
    %v439 = vpop.f32.mrb[0].mxu0
    %v440 = vadd.f32 %v197, %v439
    %v441 = vpop.f32.mrb[0].mxu0
    %442 = vmatprep.mubr.bf16.mxu0 0
    %443 = vmatmul.mubr.bf16.gmra.mrb[0].mxu0 %v149
    %v444 = vpop.f32.mrb[0].mxu0
    %v445 = vadd.f32 %v197, %v444
    %v446 = vpop.f32.mrb[0].mxu0
    %v447 = vpop.f32.mrb[0].mxu0
    %v448 = vadd.f32 %v197, %v447
    %v449 = vpop.f32.mrb[0].mxu0
    %450 = vmatprep.mubr.bf16.mxu0 0
    %451 = vmatmul.mubr.bf16.gmra.mrb[0].mxu0 %v150
    %v452 = vpop.f32.mrb[0].mxu0
    %v453 = vadd.f32 %v197, %v452
    %v454 = vpop.f32.mrb[0].mxu0
    %v455 = vpop.f32.mrb[0].mxu0
    %v456 = vadd.f32 %v197, %v455
    %v457 = vpop.f32.mrb[0].mxu0
    %458 = vmatprep.mubr.bf16.mxu0 0
    %459 = vmatmul.mubr.bf16.gmra.mrb[0].mxu0 %v151
    %v460 = vpop.f32.mrb[0].mxu0
    %v461 = vadd.f32 %v197, %v460
    %v462 = vpop.f32.mrb[0].mxu0
    %v463 = vpop.f32.mrb[0].mxu0
    %v464 = vadd.f32 %v197, %v463
    %v465 = vpop.f32.mrb[0].mxu0
    %466 = vdwg.mxu0
    %467 = vst [vmem:[#allocation3] sm:$0xff] %v364
    %468 = vst [vmem:[#allocation3 + $0x8] sm:$0xff] %v366
    %469 = vst [vmem:[#allocation3 + $0x10] sm:$0xff] %v437
    %470 = vst [vmem:[#allocation3 + $0x18] sm:$0xff] %v368
    %471 = vst [vmem:[#allocation3 + $0x20] sm:$0xff] %v370
    %472 = vst [vmem:[#allocation3 + $0x28] sm:$0xff] %v440
    %473 = vst [vmem:[#allocation3 + $0x30] sm:$0xff] %v374
    %474 = vst [vmem:[#allocation3 + $0x38] sm:$0xff] %v376
    %475 = vst [vmem:[#allocation3 + $0x40] sm:$0xff] %v445
    %476 = vst [vmem:[#allocation3 + $0x48] sm:$0xff] %v378
    %477 = vst [vmem:[#allocation3 + $0x50] sm:$0xff] %v380
    %478 = vst [vmem:[#allocation3 + $0x58] sm:$0xff] %v448
    %479 = vst [vmem:[#allocation3 + $0x60] sm:$0xff] %v384
    %480 = vst [vmem:[#allocation3 + $0x68] sm:$0xff] %v386
    %481 = vst [vmem:[#allocation3 + $0x70] sm:$0xff] %v453
    %482 = vst [vmem:[#allocation3 + $0x78] sm:$0xff] %v388
    %483 = vst [vmem:[#allocation3 + $0x80] sm:$0xff] %v390
    %484 = vst [vmem:[#allocation3 + $0x88] sm:$0xff] %v456
    %485 = vst [vmem:[#allocation3 + $0x90] sm:$0xff] %v394
    %486 = vst [vmem:[#allocation3 + $0x98] sm:$0xff] %v396
    %487 = vst [vmem:[#allocation3 + $0xa0] sm:$0xff] %v461
    %488 = vst [vmem:[#allocation3 + $0xa8] sm:$0xff] %v398
    %489 = vst [vmem:[#allocation3 + $0xb0] sm:$0xff] %v400
    %490 = vst [vmem:[#allocation3 + $0xb8] sm:$0xff] %v464
    loop: start=0, step=1, limit=8
    $region70: #{tpu_custom_call.1} parent=1 // loop_pre_header
      _
    $region71: #{tpu_custom_call.1} parent=1 // loop_header
      %s492 = sphi 0, %s496
      %p493 = scmp.ge.s32.totalorder %s492, 8
    $region72: #{tpu_custom_call.1} parent=1 // loop_header_branch
      %495 = sbr.rel (%p493) target = $region76
    $region73: #{tpu_custom_call.1} parent=1 // loop_body
      %s497 = smul.u32 %s492, 8
      %v498 = vld [vmem:[#allocation2] sm:$0xff]
      %s499 = sshra.s32 %s497, 3
      %s500 = sand.u32 %s497, 7
      %s501 = smul.u32 %s499, 3
      %s502 = smul.addr %s501, 8
      %s503 = scalar_lea.vmem [#allocation3], %s502
      %v504 = vld [vmem:[%s503] sm:$0xff]
      %v505 = vld [vmem:[%s503 + $0x8] sm:$0xff]
      %v506 = vld [vmem:[%s503 + $0x10] sm:$0xff]
      %v507 = vpack.c.bf16 %v498, %v498
      %v508 = vld [vmem:[#allocation13] sm:$0xff]
      %v509 = vld [vmem:[#allocation13 + $0x8] sm:$0xff]
      %v510 = vld [vmem:[#allocation13 + $0x10] sm:$0xff]
      %v511 = vld [vmem:[#allocation13 + $0x18] sm:$0xff]
      %v512 = vld [vmem:[#allocation13 + $0x20] sm:$0xff]
      %v513 = vld [vmem:[#allocation13 + $0x28] sm:$0xff]
      %v514 = vld [vmem:[#allocation13 + $0x30] sm:$0xff]
      %v515 = vld [vmem:[#allocation13 + $0x38] sm:$0xff]
      %v516 = vld [vmem:[#allocation13 + $0x40] sm:$0xff]
      %v517 = vld [vmem:[#allocation13 + $0x48] sm:$0xff]
      %v518 = vld [vmem:[#allocation13 + $0x50] sm:$0xff]
      %v519 = vld [vmem:[#allocation13 + $0x58] sm:$0xff]
      %v520 = vld [vmem:[#allocation13 + $0x60] sm:$0xff]
      %v521 = vld [vmem:[#allocation13 + $0x68] sm:$0xff]
      %v522 = vld [vmem:[#allocation13 + $0x70] sm:$0xff]
      %v523 = vld [vmem:[#allocation13 + $0x78] sm:$0xff]
      %v540 = vunpack.c.l.b16 %v508
      %v541 = vunpack.c.h.b16 %v508
      %v542 = vunpack.c.l.b16 %v509
      %v543 = vunpack.c.h.b16 %v509
      %v544 = vunpack.c.l.b16 %v510
      %v545 = vunpack.c.h.b16 %v510
      %v546 = vunpack.c.l.b16 %v511
      %v547 = vunpack.c.h.b16 %v511
      %v548 = vunpack.c.l.b16 %v512
      %v549 = vunpack.c.h.b16 %v512
      %v550 = vunpack.c.l.b16 %v513
      %v551 = vunpack.c.h.b16 %v513
      %v552 = vunpack.c.l.b16 %v514
      %v553 = vunpack.c.h.b16 %v514
      %v554 = vunpack.c.l.b16 %v515
      %v555 = vunpack.c.h.b16 %v515
      %v556 = vunpack.c.l.b16 %v516
      %v557 = vunpack.c.h.b16 %v516
      %v558 = vunpack.c.l.b16 %v517
      %v559 = vunpack.c.h.b16 %v517
      %v560 = vunpack.c.l.b16 %v518
      %v561 = vunpack.c.h.b16 %v518
      %v562 = vunpack.c.l.b16 %v519
      %v563 = vunpack.c.h.b16 %v519
      %v564 = vunpack.c.l.b16 %v520
      %v565 = vunpack.c.h.b16 %v520
      %v566 = vunpack.c.l.b16 %v521
      %v567 = vunpack.c.h.b16 %v521
      %v568 = vunpack.c.l.b16 %v522
      %v569 = vunpack.c.h.b16 %v522
      %v570 = vunpack.c.l.b16 %v523
      %v571 = vunpack.c.h.b16 %v523
      %v572 = vpack.c.b16 %v542, %v540
      %v573 = vpack.c.b16 %v543, %v541
      %v574 = vpack.c.b16 %v546, %v544
      %v575 = vpack.c.b16 %v547, %v545
      %v576 = vpack.c.b16 %v550, %v548
      %v577 = vpack.c.b16 %v551, %v549
      %v578 = vpack.c.b16 %v554, %v552
      %v579 = vpack.c.b16 %v555, %v553
      %v580 = vpack.c.b16 %v558, %v556
      %v581 = vpack.c.b16 %v559, %v557
      %v582 = vpack.c.b16 %v562, %v560
      %v583 = vpack.c.b16 %v563, %v561
      %v584 = vpack.c.b16 %v566, %v564
      %v585 = vpack.c.b16 %v567, %v565
      %v586 = vpack.c.b16 %v570, %v568
      %v587 = vpack.c.b16 %v571, %v569
      %604 = vmatprep.subr.bf16.mxu0 %v573
      %605 = vmatpush1.bf16.msra.mxu0 %v572
      %606 = vmatprep.subr.bf16.mxu0 %v575
      %607 = vmatpush1.bf16.msra.mxu0 %v574
      %608 = vmatprep.subr.bf16.mxu0 %v577
      %609 = vmatpush1.bf16.msra.mxu0 %v576
      %610 = vmatprep.subr.bf16.mxu0 %v579
      %611 = vmatpush1.bf16.msra.mxu0 %v578
      %612 = vmatprep.subr.bf16.mxu0 %v581
      %613 = vmatpush1.bf16.msra.mxu0 %v580
      %614 = vmatprep.subr.bf16.mxu0 %v583
      %615 = vmatpush1.bf16.msra.mxu0 %v582
      %616 = vmatprep.subr.bf16.mxu0 %v585
      %617 = vmatpush1.bf16.msra.mxu0 %v584
      %618 = vmatprep.subr.bf16.mxu0 %v587
      %619 = vmatpush1.bf16.msra.mxu0 %v586
      %620 = vmatprep.subr.bf16.mxu0 0
      %621 = vmatpush1.bf16.msra.mxu0 0
      %622 = vmatprep.subr.bf16.mxu0 0
      %623 = vmatpush1.bf16.msra.mxu0 0
      %624 = vmatprep.subr.bf16.mxu0 0
      %625 = vmatpush1.bf16.msra.mxu0 0
      %626 = vmatprep.subr.bf16.mxu0 0
      %627 = vmatpush1.bf16.msra.mxu0 0
      %628 = vmatprep.subr.bf16.mxu0 0
      %629 = vmatpush1.bf16.msra.mxu0 0
      %630 = vmatprep.subr.bf16.mxu0 0
      %631 = vmatpush1.bf16.msra.mxu0 0
      %632 = vmatprep.subr.bf16.mxu0 0
      %633 = vmatpush1.bf16.msra.mxu0 0
      %634 = vmatprep.subr.bf16.mxu0 0
      %635 = vmatpush1.bf16.msra.mxu0 0
      %636 = vmatprep.mubr.bf16.mxu0 0
      %637 = vmatmul.mubr.bf16.gmra.mrb[0].mxu0 %v507
      %v638 = vpop.f32.mrb[0].mxu0
      %v639 = vadd.f32 0.0, %v638
      %v640 = vpop.f32.mrb[0].mxu0
      %v641 = vadd.f32 0.0, %v640
      %v642 = vpop.f32.mrb[0].mxu0
      %v643 = vpop.f32.mrb[0].mxu0
      %644 = vdwg.mxu0
      %v645 = vadd.f32 %v504, %v639
      %v646 = vadd.f32 %v505, %v641
      %v647 = vxor.u32 %v645, 2147483648
      %v648 = vxor.u32 %v646, 2147483648
      %v649 = vmul.f32 %v647, 1.442695
      %v650 = vpow.pop %v649
      %v651 = vmul.f32 %v648, 1.442695
      %v652 = vpow.pop %v651
      %v653 = vadd.f32 %v650, 1.0
      %v654 = vadd.f32 %v652, 1.0
      %v655 = vrcp.pop %v653
      %v656 = vmul.f32 1.0, %v655
      %v657 = vrcp.pop %v654
      %v658 = vmul.f32 1.0, %v657
      %v659 = vmul.f32 %v658, %v498
      %v660 = vpack.c.bf16 %v659, %v659
      %v661 = vld [vmem:[#allocation14] sm:$0xf]
      %v662 = vld [vmem:[#allocation14 + $0x4] sm:$0xf]
      %v663 = vld [vmem:[#allocation14 + $0x8] sm:$0xf]
      %v664 = vld [vmem:[#allocation14 + $0xc] sm:$0xf]
      %v665 = vld [vmem:[#allocation14 + $0x10] sm:$0xf]
      %v666 = vld [vmem:[#allocation14 + $0x14] sm:$0xf]
      %v667 = vld [vmem:[#allocation14 + $0x18] sm:$0xf]
      %v668 = vld [vmem:[#allocation14 + $0x1c] sm:$0xf]
      %v669 = vld [vmem:[#allocation14 + $0x20] sm:$0xf]
      %v670 = vld [vmem:[#allocation14 + $0x24] sm:$0xf]
      %v671 = vld [vmem:[#allocation14 + $0x28] sm:$0xf]
      %v672 = vld [vmem:[#allocation14 + $0x2c] sm:$0xf]
      %v673 = vld [vmem:[#allocation14 + $0x30] sm:$0xf]
      %v674 = vld [vmem:[#allocation14 + $0x34] sm:$0xf]
      %v675 = vld [vmem:[#allocation14 + $0x38] sm:$0xf]
      %v676 = vld [vmem:[#allocation14 + $0x3c] sm:$0xf]
      %v693 = vunpack.c.l.b16 %v661
      %v694 = vunpack.c.l.b16 %v662
      %v695 = vunpack.c.l.b16 %v663
      %v696 = vunpack.c.l.b16 %v664
      %v697 = vunpack.c.l.b16 %v665
      %v698 = vunpack.c.l.b16 %v666
      %v699 = vunpack.c.l.b16 %v667
      %v700 = vunpack.c.l.b16 %v668
      %v701 = vunpack.c.l.b16 %v669
      %v702 = vunpack.c.l.b16 %v670
      %v703 = vunpack.c.l.b16 %v671
      %v704 = vunpack.c.l.b16 %v672
      %v705 = vunpack.c.l.b16 %v673
      %v706 = vunpack.c.l.b16 %v674
      %v707 = vunpack.c.l.b16 %v675
      %v708 = vunpack.c.l.b16 %v676
      %v709 = vpack.c.b16 %v694, %v693
      %v710 = vpack.c.b16 %v696, %v695
      %v711 = vpack.c.b16 %v698, %v697
      %v712 = vpack.c.b16 %v700, %v699
      %v713 = vpack.c.b16 %v702, %v701
      %v714 = vpack.c.b16 %v704, %v703
      %v715 = vpack.c.b16 %v706, %v705
      %v716 = vpack.c.b16 %v708, %v707
      %725 = vmatprep.subr.bf16.mxu0 0
      %726 = vmatpush1.bf16.msra.mxu0 %v709
      %727 = vmatprep.subr.bf16.mxu0 0
      %728 = vmatpush1.bf16.msra.mxu0 %v710
      %729 = vmatprep.subr.bf16.mxu0 0
      %730 = vmatpush1.bf16.msra.mxu0 %v711
      %731 = vmatprep.subr.bf16.mxu0 0
      %732 = vmatpush1.bf16.msra.mxu0 %v712
      %733 = vmatprep.subr.bf16.mxu0 0
      %734 = vmatpush1.bf16.msra.mxu0 %v713
      %735 = vmatprep.subr.bf16.mxu0 0
      %736 = vmatpush1.bf16.msra.mxu0 %v714
      %737 = vmatprep.subr.bf16.mxu0 0
      %738 = vmatpush1.bf16.msra.mxu0 %v715
      %739 = vmatprep.subr.bf16.mxu0 0
      %740 = vmatpush1.bf16.msra.mxu0 %v716
      %741 = vmatprep.subr.bf16.mxu0 0
      %742 = vmatpush1.bf16.msra.mxu0 0
      %743 = vmatprep.subr.bf16.mxu0 0
      %744 = vmatpush1.bf16.msra.mxu0 0
      %745 = vmatprep.subr.bf16.mxu0 0
      %746 = vmatpush1.bf16.msra.mxu0 0
      %747 = vmatprep.subr.bf16.mxu0 0
      %748 = vmatpush1.bf16.msra.mxu0 0
      %749 = vmatprep.subr.bf16.mxu0 0
      %750 = vmatpush1.bf16.msra.mxu0 0
      %751 = vmatprep.subr.bf16.mxu0 0
      %752 = vmatpush1.bf16.msra.mxu0 0
      %753 = vmatprep.subr.bf16.mxu0 0
      %754 = vmatpush1.bf16.msra.mxu0 0
      %755 = vmatprep.subr.bf16.mxu0 0
      %756 = vmatpush1.bf16.msra.mxu0 0
      %757 = vmatprep.mubr.bf16.mxu0 0
      %758 = vmatmul.mubr.bf16.gmra.mrb[0].mxu0 %v660
      %v759 = vpop.f32.mrb[0].mxu0
      %v760 = vadd.f32 0.0, %v759
      %v761 = vpop.f32.mrb[0].mxu0
      %v762 = vpop.f32.mrb[0].mxu0
      %v763 = vpop.f32.mrb[0].mxu0
      %764 = vdwg.mxu0
      %v765 = vadd.f32 %v506, %v760
      %v766 = vtanh.pop %v765
      %v767 = vmul.f32 %v498, %v656
      %v768 = vsub.f32 1.0, %v656
      %v769 = vmul.f32 %v768, %v766
      %v770 = vadd.f32 %v767, %v769
      %771 = vst [vmem:[#allocation2] sm:$0xff] %v770
      %s772 = scalar_lea.vmem [#allocation4], %s497
      %773 = vst [vmem:[%s772] sm:$0xff] %v770
    $region74: #{tpu_custom_call.1} parent=1 // loop_footer
      %s496 = sadd.s32 1, %s492
    $region75: #{tpu_custom_call.1} parent=1 // loop_footer_branch
      %491 = sbr.rel target = $region71
    $region76: #{tpu_custom_call.1} parent=1 // loop_exit
      _
    %v774 = vld [vmem:[#allocation4] sm:$0xff]
    %v775 = vld [vmem:[#allocation4 + $0x8] sm:$0xff]
    %v776 = vld [vmem:[#allocation4 + $0x10] sm:$0xff]
    %v777 = vld [vmem:[#allocation4 + $0x18] sm:$0xff]
    %v778 = vld [vmem:[#allocation4 + $0x20] sm:$0xff]
    %v779 = vld [vmem:[#allocation4 + $0x28] sm:$0xff]
    %v780 = vld [vmem:[#allocation4 + $0x30] sm:$0xff]
    %v781 = vld [vmem:[#allocation4 + $0x38] sm:$0xff]
    %v782 = vpack.c.bf16 %v775, %v774
    %v783 = vpack.c.bf16 %v777, %v776
    %v784 = vpack.c.bf16 %v779, %v778
    %v785 = vpack.c.bf16 %v781, %v780
    %s786 = scalar_lea.vmem [#allocation11], 192
    %v787 = vld [vmem:[%s786] sm:$0xff]
    %v788 = vld [vmem:[%s786 + $0x8] sm:$0xf]
    %v789 = vld [vmem:[%s786 + $0xc] sm:$0xff]
    %v790 = vld [vmem:[%s786 + $0x14] sm:$0xf]
    %v791 = vld [vmem:[%s786 + $0x18] sm:$0xff]
    %v792 = vld [vmem:[%s786 + $0x20] sm:$0xf]
    %v793 = vld [vmem:[%s786 + $0x24] sm:$0xff]
    %v794 = vld [vmem:[%s786 + $0x2c] sm:$0xf]
    %v795 = vld [vmem:[%s786 + $0x30] sm:$0xff]
    %v796 = vld [vmem:[%s786 + $0x38] sm:$0xf]
    %v797 = vld [vmem:[%s786 + $0x3c] sm:$0xff]
    %v798 = vld [vmem:[%s786 + $0x44] sm:$0xf]
    %v799 = vld [vmem:[%s786 + $0x48] sm:$0xff]
    %v800 = vld [vmem:[%s786 + $0x50] sm:$0xf]
    %v801 = vld [vmem:[%s786 + $0x54] sm:$0xff]
    %v802 = vld [vmem:[%s786 + $0x5c] sm:$0xf]
    %v803 = vld [vmem:[%s786 + $0x60] sm:$0xff]
    %v804 = vld [vmem:[%s786 + $0x68] sm:$0xf]
    %v805 = vld [vmem:[%s786 + $0x6c] sm:$0xff]
    %v806 = vld [vmem:[%s786 + $0x74] sm:$0xf]
    %v807 = vld [vmem:[%s786 + $0x78] sm:$0xff]
    %v808 = vld [vmem:[%s786 + $0x80] sm:$0xf]
    %v809 = vld [vmem:[%s786 + $0x84] sm:$0xff]
    %v810 = vld [vmem:[%s786 + $0x8c] sm:$0xf]
    %v811 = vld [vmem:[%s786 + $0x90] sm:$0xff]
    %v812 = vld [vmem:[%s786 + $0x98] sm:$0xf]
    %v813 = vld [vmem:[%s786 + $0x9c] sm:$0xff]
    %v814 = vld [vmem:[%s786 + $0xa4] sm:$0xf]
    %v815 = vld [vmem:[%s786 + $0xa8] sm:$0xff]
    %v816 = vld [vmem:[%s786 + $0xb0] sm:$0xf]
    %v817 = vld [vmem:[%s786 + $0xb4] sm:$0xff]
    %v818 = vld [vmem:[%s786 + $0xbc] sm:$0xf]
    %s819 = scalar_lea.vmem %s6, 3
    %v820 = vld [vmem:[%s819] sm:$0x7]
    %v822 = vlaneseq
    %v823 = vshrl.u32 %v822, 7
    %v824 = vsub.s32 0, %v823
    %v825 = vrot.slane %v820, %v824
    %v826 = vlaneseq
    %v827 = vshrl.u32 %v826, 7
    %v828 = vsub.s32 1, %v827
    %v829 = vrot.slane %v820, %v828
    %v830 = vlaneseq
    %v831 = vshrl.u32 %v830, 7
    %v832 = vsub.s32 2, %v831
    %v833 = vrot.slane %v820, %v832
    %v869 = vunpack.c.l.b16 %v787
    %v870 = vunpack.c.h.b16 %v787
    %v871 = vunpack.c.l.b16 %v788
    %v872 = vunpack.c.l.b16 %v789
    %v873 = vunpack.c.h.b16 %v789
    %v874 = vunpack.c.l.b16 %v790
    %v875 = vunpack.c.l.b16 %v791
    %v876 = vunpack.c.h.b16 %v791
    %v877 = vunpack.c.l.b16 %v792
    %v878 = vunpack.c.l.b16 %v793
    %v879 = vunpack.c.h.b16 %v793
    %v880 = vunpack.c.l.b16 %v794
    %v881 = vunpack.c.l.b16 %v795
    %v882 = vunpack.c.h.b16 %v795
    %v883 = vunpack.c.l.b16 %v796
    %v884 = vunpack.c.l.b16 %v797
    %v885 = vunpack.c.h.b16 %v797
    %v886 = vunpack.c.l.b16 %v798
    %v887 = vunpack.c.l.b16 %v799
    %v888 = vunpack.c.h.b16 %v799
    %v889 = vunpack.c.l.b16 %v800
    %v890 = vunpack.c.l.b16 %v801
    %v891 = vunpack.c.h.b16 %v801
    %v892 = vunpack.c.l.b16 %v802
    %v893 = vunpack.c.l.b16 %v803
    %v894 = vunpack.c.h.b16 %v803
    %v895 = vunpack.c.l.b16 %v804
    %v896 = vunpack.c.l.b16 %v805
    %v897 = vunpack.c.h.b16 %v805
    %v898 = vunpack.c.l.b16 %v806
    %v899 = vunpack.c.l.b16 %v807
    %v900 = vunpack.c.h.b16 %v807
    %v901 = vunpack.c.l.b16 %v808
    %v902 = vunpack.c.l.b16 %v809
    %v903 = vunpack.c.h.b16 %v809
    %v904 = vunpack.c.l.b16 %v810
    %v905 = vunpack.c.l.b16 %v811
    %v906 = vunpack.c.h.b16 %v811
    %v907 = vunpack.c.l.b16 %v812
    %v908 = vunpack.c.l.b16 %v813
    %v909 = vunpack.c.h.b16 %v813
    %v910 = vunpack.c.l.b16 %v814
    %v911 = vunpack.c.l.b16 %v815
    %v912 = vunpack.c.h.b16 %v815
    %v913 = vunpack.c.l.b16 %v816
    %v914 = vunpack.c.l.b16 %v817
    %v915 = vunpack.c.h.b16 %v817
    %v916 = vunpack.c.l.b16 %v818
    %v917 = vpack.c.b16 %v872, %v869
    %v918 = vpack.c.b16 %v873, %v870
    %v919 = vpack.c.b16 %v874, %v871
    %v920 = vpack.c.b16 %v878, %v875
    %v921 = vpack.c.b16 %v879, %v876
    %v922 = vpack.c.b16 %v880, %v877
    %v923 = vpack.c.b16 %v884, %v881
    %v924 = vpack.c.b16 %v885, %v882
    %v925 = vpack.c.b16 %v886, %v883
    %v926 = vpack.c.b16 %v890, %v887
    %v927 = vpack.c.b16 %v891, %v888
    %v928 = vpack.c.b16 %v892, %v889
    %v929 = vpack.c.b16 %v896, %v893
    %v930 = vpack.c.b16 %v897, %v894
    %v931 = vpack.c.b16 %v898, %v895
    %v932 = vpack.c.b16 %v902, %v899
    %v933 = vpack.c.b16 %v903, %v900
    %v934 = vpack.c.b16 %v904, %v901
    %v935 = vpack.c.b16 %v908, %v905
    %v936 = vpack.c.b16 %v909, %v906
    %v937 = vpack.c.b16 %v910, %v907
    %v938 = vpack.c.b16 %v914, %v911
    %v939 = vpack.c.b16 %v915, %v912
    %v940 = vpack.c.b16 %v916, %v913
    %965 = vmatprep.subr.bf16.mxu0 %v918
    %966 = vmatpush1.bf16.msra.mxu0 %v917
    %967 = vmatprep.subr.bf16.mxu0 %v921
    %968 = vmatpush1.bf16.msra.mxu0 %v920
    %969 = vmatprep.subr.bf16.mxu0 %v924
    %970 = vmatpush1.bf16.msra.mxu0 %v923
    %971 = vmatprep.subr.bf16.mxu0 %v927
    %972 = vmatpush1.bf16.msra.mxu0 %v926
    %973 = vmatprep.subr.bf16.mxu0 %v930
    %974 = vmatpush1.bf16.msra.mxu0 %v929
    %975 = vmatprep.subr.bf16.mxu0 %v933
    %976 = vmatpush1.bf16.msra.mxu0 %v932
    %977 = vmatprep.subr.bf16.mxu0 %v936
    %978 = vmatpush1.bf16.msra.mxu0 %v935
    %979 = vmatprep.subr.bf16.mxu0 %v939
    %980 = vmatpush1.bf16.msra.mxu0 %v938
    %981 = vmatprep.subr.bf16.mxu0 0
    %982 = vmatpush1.bf16.msra.mxu0 0
    %983 = vmatprep.subr.bf16.mxu0 0
    %984 = vmatpush1.bf16.msra.mxu0 0
    %985 = vmatprep.subr.bf16.mxu0 0
    %986 = vmatpush1.bf16.msra.mxu0 0
    %987 = vmatprep.subr.bf16.mxu0 0
    %988 = vmatpush1.bf16.msra.mxu0 0
    %989 = vmatprep.subr.bf16.mxu0 0
    %990 = vmatpush1.bf16.msra.mxu0 0
    %991 = vmatprep.subr.bf16.mxu0 0
    %992 = vmatpush1.bf16.msra.mxu0 0
    %993 = vmatprep.subr.bf16.mxu0 0
    %994 = vmatpush1.bf16.msra.mxu0 0
    %995 = vmatprep.subr.bf16.mxu0 0
    %996 = vmatpush1.bf16.msra.mxu0 0
    %997 = vmatprep.mubr.bf16.mxu0 0
    %998 = vmatmul.mubr.bf16.gmra.mrb[0].mxu0 %v782
    %v999 = vpop.f32.mrb[0].mxu0
    %v1000 = vadd.f32 %v825, %v999
    %v1001 = vpop.f32.mrb[0].mxu0
    %v1002 = vadd.f32 %v829, %v1001
    %v1003 = vpop.f32.mrb[0].mxu0
    %v1004 = vadd.f32 %v825, %v1003
    %v1005 = vpop.f32.mrb[0].mxu0
    %v1006 = vadd.f32 %v829, %v1005
    %1007 = vmatprep.mubr.bf16.mxu0 0
    %1008 = vmatmul.mubr.bf16.gmra.mrb[0].mxu0 %v783
    %v1009 = vpop.f32.mrb[0].mxu0
    %v1010 = vadd.f32 %v825, %v1009
    %v1011 = vpop.f32.mrb[0].mxu0
    %v1012 = vadd.f32 %v829, %v1011
    %v1013 = vpop.f32.mrb[0].mxu0
    %v1014 = vadd.f32 %v825, %v1013
    %v1015 = vpop.f32.mrb[0].mxu0
    %v1016 = vadd.f32 %v829, %v1015
    %1017 = vmatprep.mubr.bf16.mxu0 0
    %1018 = vmatmul.mubr.bf16.gmra.mrb[0].mxu0 %v784
    %v1019 = vpop.f32.mrb[0].mxu0
    %v1020 = vadd.f32 %v825, %v1019
    %v1021 = vpop.f32.mrb[0].mxu0
    %v1022 = vadd.f32 %v829, %v1021
    %v1023 = vpop.f32.mrb[0].mxu0
    %v1024 = vadd.f32 %v825, %v1023
    %v1025 = vpop.f32.mrb[0].mxu0
    %v1026 = vadd.f32 %v829, %v1025
    %1027 = vmatprep.mubr.bf16.mxu0 0
    %1028 = vmatmul.mubr.bf16.gmra.mrb[0].mxu0 %v785
    %v1029 = vpop.f32.mrb[0].mxu0
    %v1030 = vadd.f32 %v825, %v1029
    %v1031 = vpop.f32.mrb[0].mxu0
    %v1032 = vadd.f32 %v829, %v1031
    %v1033 = vpop.f32.mrb[0].mxu0
    %v1034 = vadd.f32 %v825, %v1033
    %v1035 = vpop.f32.mrb[0].mxu0
    %v1036 = vadd.f32 %v829, %v1035
    %1037 = vdwg.mxu0
    %1038 = vmatprep.subr.bf16.mxu0 0
    %1039 = vmatpush1.bf16.msra.mxu0 %v919
    %1040 = vmatprep.subr.bf16.mxu0 0
    %1041 = vmatpush1.bf16.msra.mxu0 %v922
    %1042 = vmatprep.subr.bf16.mxu0 0
    %1043 = vmatpush1.bf16.msra.mxu0 %v925
    %1044 = vmatprep.subr.bf16.mxu0 0
    %1045 = vmatpush1.bf16.msra.mxu0 %v928
    %1046 = vmatprep.subr.bf16.mxu0 0
    %1047 = vmatpush1.bf16.msra.mxu0 %v931
    %1048 = vmatprep.subr.bf16.mxu0 0
    %1049 = vmatpush1.bf16.msra.mxu0 %v934
    %1050 = vmatprep.subr.bf16.mxu0 0
    %1051 = vmatpush1.bf16.msra.mxu0 %v937
    %1052 = vmatprep.subr.bf16.mxu0 0
    %1053 = vmatpush1.bf16.msra.mxu0 %v940
    %1054 = vmatprep.subr.bf16.mxu0 0
    %1055 = vmatpush1.bf16.msra.mxu0 0
    %1056 = vmatprep.subr.bf16.mxu0 0
    %1057 = vmatpush1.bf16.msra.mxu0 0
    %1058 = vmatprep.subr.bf16.mxu0 0
    %1059 = vmatpush1.bf16.msra.mxu0 0
    %1060 = vmatprep.subr.bf16.mxu0 0
    %1061 = vmatpush1.bf16.msra.mxu0 0
    %1062 = vmatprep.subr.bf16.mxu0 0
    %1063 = vmatpush1.bf16.msra.mxu0 0
    %1064 = vmatprep.subr.bf16.mxu0 0
    %1065 = vmatpush1.bf16.msra.mxu0 0
    %1066 = vmatprep.subr.bf16.mxu0 0
    %1067 = vmatpush1.bf16.msra.mxu0 0
    %1068 = vmatprep.subr.bf16.mxu0 0
    %1069 = vmatpush1.bf16.msra.mxu0 0
    %1070 = vmatprep.mubr.bf16.mxu0 0
    %1071 = vmatmul.mubr.bf16.gmra.mrb[0].mxu0 %v782
    %v1072 = vpop.f32.mrb[0].mxu0
    %v1073 = vadd.f32 %v833, %v1072
    %v1074 = vpop.f32.mrb[0].mxu0
    %v1075 = vpop.f32.mrb[0].mxu0
    %v1076 = vadd.f32 %v833, %v1075
    %v1077 = vpop.f32.mrb[0].mxu0
    %1078 = vmatprep.mubr.bf16.mxu0 0
    %1079 = vmatmul.mubr.bf16.gmra.mrb[0].mxu0 %v783
    %v1080 = vpop.f32.mrb[0].mxu0
    %v1081 = vadd.f32 %v833, %v1080
    %v1082 = vpop.f32.mrb[0].mxu0
    %v1083 = vpop.f32.mrb[0].mxu0
    %v1084 = vadd.f32 %v833, %v1083
    %v1085 = vpop.f32.mrb[0].mxu0
    %1086 = vmatprep.mubr.bf16.mxu0 0
    %1087 = vmatmul.mubr.bf16.gmra.mrb[0].mxu0 %v784
    %v1088 = vpop.f32.mrb[0].mxu0
    %v1089 = vadd.f32 %v833, %v1088
    %v1090 = vpop.f32.mrb[0].mxu0
    %v1091 = vpop.f32.mrb[0].mxu0
    %v1092 = vadd.f32 %v833, %v1091
    %v1093 = vpop.f32.mrb[0].mxu0
    %1094 = vmatprep.mubr.bf16.mxu0 0
    %1095 = vmatmul.mubr.bf16.gmra.mrb[0].mxu0 %v785
    %v1096 = vpop.f32.mrb[0].mxu0
    %v1097 = vadd.f32 %v833, %v1096
    %v1098 = vpop.f32.mrb[0].mxu0
    %v1099 = vpop.f32.mrb[0].mxu0
    %v1100 = vadd.f32 %v833, %v1099
    %v1101 = vpop.f32.mrb[0].mxu0
    %1102 = vdwg.mxu0
    %1103 = vst [vmem:[#allocation3] sm:$0xff] %v1000
    %1104 = vst [vmem:[#allocation3 + $0x8] sm:$0xff] %v1002
    %1105 = vst [vmem:[#allocation3 + $0x10] sm:$0xff] %v1073
    %1106 = vst [vmem:[#allocation3 + $0x18] sm:$0xff] %v1004
    %1107 = vst [vmem:[#allocation3 + $0x20] sm:$0xff] %v1006
    %1108 = vst [vmem:[#allocation3 + $0x28] sm:$0xff] %v1076
    %1109 = vst [vmem:[#allocation3 + $0x30] sm:$0xff] %v1010
    %1110 = vst [vmem:[#allocation3 + $0x38] sm:$0xff] %v1012
    %1111 = vst [vmem:[#allocation3 + $0x40] sm:$0xff] %v1081
    %1112 = vst [vmem:[#allocation3 + $0x48] sm:$0xff] %v1014
    %1113 = vst [vmem:[#allocation3 + $0x50] sm:$0xff] %v1016
    %1114 = vst [vmem:[#allocation3 + $0x58] sm:$0xff] %v1084
    %1115 = vst [vmem:[#allocation3 + $0x60] sm:$0xff] %v1020
    %1116 = vst [vmem:[#allocation3 + $0x68] sm:$0xff] %v1022
    %1117 = vst [vmem:[#allocation3 + $0x70] sm:$0xff] %v1089
    %1118 = vst [vmem:[#allocation3 + $0x78] sm:$0xff] %v1024
    %1119 = vst [vmem:[#allocation3 + $0x80] sm:$0xff] %v1026
    %1120 = vst [vmem:[#allocation3 + $0x88] sm:$0xff] %v1092
    %1121 = vst [vmem:[#allocation3 + $0x90] sm:$0xff] %v1030
    %1122 = vst [vmem:[#allocation3 + $0x98] sm:$0xff] %v1032
    %1123 = vst [vmem:[#allocation3 + $0xa0] sm:$0xff] %v1097
    %1124 = vst [vmem:[#allocation3 + $0xa8] sm:$0xff] %v1034
    %1125 = vst [vmem:[#allocation3 + $0xb0] sm:$0xff] %v1036
    %1126 = vst [vmem:[#allocation3 + $0xb8] sm:$0xff] %v1100
    loop: start=0, step=1, limit=8
    $region77: #{tpu_custom_call.1} parent=1 // loop_pre_header
      _
    $region78: #{tpu_custom_call.1} parent=1 // loop_header
      %s1128 = sphi 0, %s1132
      %p1129 = scmp.ge.s32.totalorder %s1128, 8
    $region79: #{tpu_custom_call.1} parent=1 // loop_header_branch
      %1131 = sbr.rel (%p1129) target = $region83
    $region80: #{tpu_custom_call.1} parent=1 // loop_body
      %s1133 = smul.u32 %s1128, 8
      %s1134 = scalar_lea.vmem [#allocation2], 8
      %v1135 = vld [vmem:[%s1134] sm:$0xff]
      %s1136 = sshra.s32 %s1133, 3
      %s1137 = sand.u32 %s1133, 7
      %s1138 = smul.u32 %s1136, 3
      %s1139 = smul.addr %s1138, 8
      %s1140 = scalar_lea.vmem [#allocation3], %s1139
      %v1141 = vld [vmem:[%s1140] sm:$0xff]
      %v1142 = vld [vmem:[%s1140 + $0x8] sm:$0xff]
      %v1143 = vld [vmem:[%s1140 + $0x10] sm:$0xff]
      %v1144 = vpack.c.bf16 %v1135, %v1135
      %s1145 = scalar_lea.vmem [#allocation13], 128
      %v1146 = vld [vmem:[%s1145] sm:$0xff]
      %v1147 = vld [vmem:[%s1145 + $0x8] sm:$0xff]
      %v1148 = vld [vmem:[%s1145 + $0x10] sm:$0xff]
      %v1149 = vld [vmem:[%s1145 + $0x18] sm:$0xff]
      %v1150 = vld [vmem:[%s1145 + $0x20] sm:$0xff]
      %v1151 = vld [vmem:[%s1145 + $0x28] sm:$0xff]
      %v1152 = vld [vmem:[%s1145 + $0x30] sm:$0xff]
      %v1153 = vld [vmem:[%s1145 + $0x38] sm:$0xff]
      %v1154 = vld [vmem:[%s1145 + $0x40] sm:$0xff]
      %v1155 = vld [vmem:[%s1145 + $0x48] sm:$0xff]
      %v1156 = vld [vmem:[%s1145 + $0x50] sm:$0xff]
      %v1157 = vld [vmem:[%s1145 + $0x58] sm:$0xff]
      %v1158 = vld [vmem:[%s1145 + $0x60] sm:$0xff]
      %v1159 = vld [vmem:[%s1145 + $0x68] sm:$0xff]
      %v1160 = vld [vmem:[%s1145 + $0x70] sm:$0xff]
      %v1161 = vld [vmem:[%s1145 + $0x78] sm:$0xff]
      %v1178 = vunpack.c.l.b16 %v1146
      %v1179 = vunpack.c.h.b16 %v1146
      %v1180 = vunpack.c.l.b16 %v1147
      %v1181 = vunpack.c.h.b16 %v1147
      %v1182 = vunpack.c.l.b16 %v1148
      %v1183 = vunpack.c.h.b16 %v1148
      %v1184 = vunpack.c.l.b16 %v1149
      %v1185 = vunpack.c.h.b16 %v1149
      %v1186 = vunpack.c.l.b16 %v1150
      %v1187 = vunpack.c.h.b16 %v1150
      %v1188 = vunpack.c.l.b16 %v1151
      %v1189 = vunpack.c.h.b16 %v1151
      %v1190 = vunpack.c.l.b16 %v1152
      %v1191 = vunpack.c.h.b16 %v1152
      %v1192 = vunpack.c.l.b16 %v1153
      %v1193 = vunpack.c.h.b16 %v1153
      %v1194 = vunpack.c.l.b16 %v1154
      %v1195 = vunpack.c.h.b16 %v1154
      %v1196 = vunpack.c.l.b16 %v1155
      %v1197 = vunpack.c.h.b16 %v1155
      %v1198 = vunpack.c.l.b16 %v1156
      %v1199 = vunpack.c.h.b16 %v1156
      %v1200 = vunpack.c.l.b16 %v1157
      %v1201 = vunpack.c.h.b16 %v1157
      %v1202 = vunpack.c.l.b16 %v1158
      %v1203 = vunpack.c.h.b16 %v1158
      %v1204 = vunpack.c.l.b16 %v1159
      %v1205 = vunpack.c.h.b16 %v1159
      %v1206 = vunpack.c.l.b16 %v1160
      %v1207 = vunpack.c.h.b16 %v1160
      %v1208 = vunpack.c.l.b16 %v1161
      %v1209 = vunpack.c.h.b16 %v1161
      %v1210 = vpack.c.b16 %v1180, %v1178
      %v1211 = vpack.c.b16 %v1181, %v1179
      %v1212 = vpack.c.b16 %v1184, %v1182
      %v1213 = vpack.c.b16 %v1185, %v1183
      %v1214 = vpack.c.b16 %v1188, %v1186
      %v1215 = vpack.c.b16 %v1189, %v1187
      %v1216 = vpack.c.b16 %v1192, %v1190
      %v1217 = vpack.c.b16 %v1193, %v1191
      %v1218 = vpack.c.b16 %v1196, %v1194
      %v1219 = vpack.c.b16 %v1197, %v1195
      %v1220 = vpack.c.b16 %v1200, %v1198
      %v1221 = vpack.c.b16 %v1201, %v1199
      %v1222 = vpack.c.b16 %v1204, %v1202
      %v1223 = vpack.c.b16 %v1205, %v1203
      %v1224 = vpack.c.b16 %v1208, %v1206
      %v1225 = vpack.c.b16 %v1209, %v1207
      %1242 = vmatprep.subr.bf16.mxu0 %v1211
      %1243 = vmatpush1.bf16.msra.mxu0 %v1210
      %1244 = vmatprep.subr.bf16.mxu0 %v1213
      %1245 = vmatpush1.bf16.msra.mxu0 %v1212
      %1246 = vmatprep.subr.bf16.mxu0 %v1215
      %1247 = vmatpush1.bf16.msra.mxu0 %v1214
      %1248 = vmatprep.subr.bf16.mxu0 %v1217
      %1249 = vmatpush1.bf16.msra.mxu0 %v1216
      %1250 = vmatprep.subr.bf16.mxu0 %v1219
      %1251 = vmatpush1.bf16.msra.mxu0 %v1218
      %1252 = vmatprep.subr.bf16.mxu0 %v1221
      %1253 = vmatpush1.bf16.msra.mxu0 %v1220
      %1254 = vmatprep.subr.bf16.mxu0 %v1223
      %1255 = vmatpush1.bf16.msra.mxu0 %v1222
      %1256 = vmatprep.subr.bf16.mxu0 %v1225
      %1257 = vmatpush1.bf16.msra.mxu0 %v1224
      %1258 = vmatprep.subr.bf16.mxu0 0
      %1259 = vmatpush1.bf16.msra.mxu0 0
      %1260 = vmatprep.subr.bf16.mxu0 0
      %1261 = vmatpush1.bf16.msra.mxu0 0
      %1262 = vmatprep.subr.bf16.mxu0 0
      %1263 = vmatpush1.bf16.msra.mxu0 0
      %1264 = vmatprep.subr.bf16.mxu0 0
      %1265 = vmatpush1.bf16.msra.mxu0 0
      %1266 = vmatprep.subr.bf16.mxu0 0
      %1267 = vmatpush1.bf16.msra.mxu0 0
      %1268 = vmatprep.subr.bf16.mxu0 0
      %1269 = vmatpush1.bf16.msra.mxu0 0
      %1270 = vmatprep.subr.bf16.mxu0 0
      %1271 = vmatpush1.bf16.msra.mxu0 0
      %1272 = vmatprep.subr.bf16.mxu0 0
      %1273 = vmatpush1.bf16.msra.mxu0 0
      %1274 = vmatprep.mubr.bf16.mxu0 0
      %1275 = vmatmul.mubr.bf16.gmra.mrb[0].mxu0 %v1144
      %v1276 = vpop.f32.mrb[0].mxu0
      %v1277 = vadd.f32 0.0, %v1276
      %v1278 = vpop.f32.mrb[0].mxu0
      %v1279 = vadd.f32 0.0, %v1278
      %v1280 = vpop.f32.mrb[0].mxu0
      %v1281 = vpop.f32.mrb[0].mxu0
      %1282 = vdwg.mxu0
      %v1283 = vadd.f32 %v1141, %v1277
      %v1284 = vadd.f32 %v1142, %v1279
      %v1285 = vxor.u32 %v1283, 2147483648
      %v1286 = vxor.u32 %v1284, 2147483648
      %v1287 = vmul.f32 %v1285, 1.442695
      %v1288 = vpow.pop %v1287
      %v1289 = vmul.f32 %v1286, 1.442695
      %v1290 = vpow.pop %v1289
      %v1291 = vadd.f32 %v1288, 1.0
      %v1292 = vadd.f32 %v1290, 1.0
      %v1293 = vrcp.pop %v1291
      %v1294 = vmul.f32 1.0, %v1293
      %v1295 = vrcp.pop %v1292
      %v1296 = vmul.f32 1.0, %v1295
      %v1297 = vmul.f32 %v1296, %v1135
      %v1298 = vpack.c.bf16 %v1297, %v1297
      %s1299 = scalar_lea.vmem [#allocation14], 64
      %v1300 = vld [vmem:[%s1299] sm:$0xf]
      %v1301 = vld [vmem:[%s1299 + $0x4] sm:$0xf]
      %v1302 = vld [vmem:[%s1299 + $0x8] sm:$0xf]
      %v1303 = vld [vmem:[%s1299 + $0xc] sm:$0xf]
      %v1304 = vld [vmem:[%s1299 + $0x10] sm:$0xf]
      %v1305 = vld [vmem:[%s1299 + $0x14] sm:$0xf]
      %v1306 = vld [vmem:[%s1299 + $0x18] sm:$0xf]
      %v1307 = vld [vmem:[%s1299 + $0x1c] sm:$0xf]
      %v1308 = vld [vmem:[%s1299 + $0x20] sm:$0xf]
      %v1309 = vld [vmem:[%s1299 + $0x24] sm:$0xf]
      %v1310 = vld [vmem:[%s1299 + $0x28] sm:$0xf]
      %v1311 = vld [vmem:[%s1299 + $0x2c] sm:$0xf]
      %v1312 = vld [vmem:[%s1299 + $0x30] sm:$0xf]
      %v1313 = vld [vmem:[%s1299 + $0x34] sm:$0xf]
      %v1314 = vld [vmem:[%s1299 + $0x38] sm:$0xf]
      %v1315 = vld [vmem:[%s1299 + $0x3c] sm:$0xf]
      %v1332 = vunpack.c.l.b16 %v1300
      %v1333 = vunpack.c.l.b16 %v1301
      %v1334 = vunpack.c.l.b16 %v1302
      %v1335 = vunpack.c.l.b16 %v1303
      %v1336 = vunpack.c.l.b16 %v1304
      %v1337 = vunpack.c.l.b16 %v1305
      %v1338 = vunpack.c.l.b16 %v1306
      %v1339 = vunpack.c.l.b16 %v1307
      %v1340 = vunpack.c.l.b16 %v1308
      %v1341 = vunpack.c.l.b16 %v1309
      %v1342 = vunpack.c.l.b16 %v1310
      %v1343 = vunpack.c.l.b16 %v1311
      %v1344 = vunpack.c.l.b16 %v1312
      %v1345 = vunpack.c.l.b16 %v1313
      %v1346 = vunpack.c.l.b16 %v1314
      %v1347 = vunpack.c.l.b16 %v1315
      %v1348 = vpack.c.b16 %v1333, %v1332
      %v1349 = vpack.c.b16 %v1335, %v1334
      %v1350 = vpack.c.b16 %v1337, %v1336
      %v1351 = vpack.c.b16 %v1339, %v1338
      %v1352 = vpack.c.b16 %v1341, %v1340
      %v1353 = vpack.c.b16 %v1343, %v1342
      %v1354 = vpack.c.b16 %v1345, %v1344
      %v1355 = vpack.c.b16 %v1347, %v1346
      %1364 = vmatprep.subr.bf16.mxu0 0
      %1365 = vmatpush1.bf16.msra.mxu0 %v1348
      %1366 = vmatprep.subr.bf16.mxu0 0
      %1367 = vmatpush1.bf16.msra.mxu0 %v1349
      %1368 = vmatprep.subr.bf16.mxu0 0
      %1369 = vmatpush1.bf16.msra.mxu0 %v1350
      %1370 = vmatprep.subr.bf16.mxu0 0
      %1371 = vmatpush1.bf16.msra.mxu0 %v1351
      %1372 = vmatprep.subr.bf16.mxu0 0
      %1373 = vmatpush1.bf16.msra.mxu0 %v1352
      %1374 = vmatprep.subr.bf16.mxu0 0
      %1375 = vmatpush1.bf16.msra.mxu0 %v1353
      %1376 = vmatprep.subr.bf16.mxu0 0
      %1377 = vmatpush1.bf16.msra.mxu0 %v1354
      %1378 = vmatprep.subr.bf16.mxu0 0
      %1379 = vmatpush1.bf16.msra.mxu0 %v1355
      %1380 = vmatprep.subr.bf16.mxu0 0
      %1381 = vmatpush1.bf16.msra.mxu0 0
      %1382 = vmatprep.subr.bf16.mxu0 0
      %1383 = vmatpush1.bf16.msra.mxu0 0
      %1384 = vmatprep.subr.bf16.mxu0 0
      %1385 = vmatpush1.bf16.msra.mxu0 0
      %1386 = vmatprep.subr.bf16.mxu0 0
      %1387 = vmatpush1.bf16.msra.mxu0 0
      %1388 = vmatprep.subr.bf16.mxu0 0
      %1389 = vmatpush1.bf16.msra.mxu0 0
      %1390 = vmatprep.subr.bf16.mxu0 0
      %1391 = vmatpush1.bf16.msra.mxu0 0
      %1392 = vmatprep.subr.bf16.mxu0 0
      %1393 = vmatpush1.bf16.msra.mxu0 0
      %1394 = vmatprep.subr.bf16.mxu0 0
      %1395 = vmatpush1.bf16.msra.mxu0 0
      %1396 = vmatprep.mubr.bf16.mxu0 0
      %1397 = vmatmul.mubr.bf16.gmra.mrb[0].mxu0 %v1298
      %v1398 = vpop.f32.mrb[0].mxu0
      %v1399 = vadd.f32 0.0, %v1398
      %v1400 = vpop.f32.mrb[0].mxu0
      %v1401 = vpop.f32.mrb[0].mxu0
      %v1402 = vpop.f32.mrb[0].mxu0
      %1403 = vdwg.mxu0
      %v1404 = vadd.f32 %v1143, %v1399
      %v1405 = vtanh.pop %v1404
      %v1406 = vmul.f32 %v1135, %v1294
      %v1407 = vsub.f32 1.0, %v1294
      %v1408 = vmul.f32 %v1407, %v1405
      %v1409 = vadd.f32 %v1406, %v1408
      %1410 = vst [vmem:[%s1134] sm:$0xff] %v1409
      %s1411 = scalar_lea.vmem [#allocation4], %s1133
      %1412 = vst [vmem:[%s1411] sm:$0xff] %v1409
    $region81: #{tpu_custom_call.1} parent=1 // loop_footer
      %s1132 = sadd.s32 1, %s1128
    $region82: #{tpu_custom_call.1} parent=1 // loop_footer_branch
      %1127 = sbr.rel target = $region78
    $region83: #{tpu_custom_call.1} parent=1 // loop_exit
      _
    %v1413 = vld [vmem:[#allocation4] sm:$0xff]
    %v1414 = vld [vmem:[#allocation4 + $0x8] sm:$0xff]
    %v1415 = vld [vmem:[#allocation4 + $0x10] sm:$0xff]
    %v1416 = vld [vmem:[#allocation4 + $0x18] sm:$0xff]
    %v1417 = vld [vmem:[#allocation4 + $0x20] sm:$0xff]
    %v1418 = vld [vmem:[#allocation4 + $0x28] sm:$0xff]
    %v1419 = vld [vmem:[#allocation4 + $0x30] sm:$0xff]
    %v1420 = vld [vmem:[#allocation4 + $0x38] sm:$0xff]
    %v1421 = vpack.c.bf16 %v1414, %v1413
    %v1422 = vpack.c.bf16 %v1416, %v1415
    %v1423 = vpack.c.bf16 %v1418, %v1417
    %v1424 = vpack.c.bf16 %v1420, %v1419
    %v1425 = vld [vmem:[#allocation16] sm:$0xf]
    %v1426 = vld [vmem:[#allocation16 + $0x4] sm:$0xf]
    %v1427 = vld [vmem:[#allocation16 + $0x8] sm:$0xf]
    %v1428 = vld [vmem:[#allocation16 + $0xc] sm:$0xf]
    %v1429 = vld [vmem:[#allocation16 + $0x10] sm:$0xf]
    %v1430 = vld [vmem:[#allocation16 + $0x14] sm:$0xf]
    %v1431 = vld [vmem:[#allocation16 + $0x18] sm:$0xf]
    %v1432 = vld [vmem:[#allocation16 + $0x1c] sm:$0xf]
    %v1433 = vld [vmem:[#allocation16 + $0x20] sm:$0xf]
    %v1434 = vld [vmem:[#allocation16 + $0x24] sm:$0xf]
    %v1435 = vld [vmem:[#allocation16 + $0x28] sm:$0xf]
    %v1436 = vld [vmem:[#allocation16 + $0x2c] sm:$0xf]
    %v1437 = vld [vmem:[#allocation16 + $0x30] sm:$0xf]
    %v1438 = vld [vmem:[#allocation16 + $0x34] sm:$0xf]
    %v1439 = vld [vmem:[#allocation16 + $0x38] sm:$0xf]
    %v1440 = vld [vmem:[#allocation16 + $0x3c] sm:$0xf]
    %v1441 = vld [vmem:[%s8] sm:$0x1]
    %v1443 = vlaneseq
    %v1444 = vshrl.u32 %v1443, 7
    %v1445 = vsub.s32 0, %v1444
    %v1446 = vrot.slane %v1441, %v1445
    %v1464 = vunpack.c.l.b16 %v1425
    %v1465 = vunpack.c.l.b16 %v1426
    %v1466 = vunpack.c.l.b16 %v1427
    %v1467 = vunpack.c.l.b16 %v1428
    %v1468 = vunpack.c.l.b16 %v1429
    %v1469 = vunpack.c.l.b16 %v1430
    %v1470 = vunpack.c.l.b16 %v1431
    %v1471 = vunpack.c.l.b16 %v1432
    %v1472 = vunpack.c.l.b16 %v1433
    %v1473 = vunpack.c.l.b16 %v1434
    %v1474 = vunpack.c.l.b16 %v1435
    %v1475 = vunpack.c.l.b16 %v1436
    %v1476 = vunpack.c.l.b16 %v1437
    %v1477 = vunpack.c.l.b16 %v1438
    %v1478 = vunpack.c.l.b16 %v1439
    %v1479 = vunpack.c.l.b16 %v1440
    %v1480 = vpack.c.b16 %v1465, %v1464
    %v1481 = vpack.c.b16 %v1467, %v1466
    %v1482 = vpack.c.b16 %v1469, %v1468
    %v1483 = vpack.c.b16 %v1471, %v1470
    %v1484 = vpack.c.b16 %v1473, %v1472
    %v1485 = vpack.c.b16 %v1475, %v1474
    %v1486 = vpack.c.b16 %v1477, %v1476
    %v1487 = vpack.c.b16 %v1479, %v1478
    %1496 = vmatprep.subr.bf16.mxu0 0
    %1497 = vmatpush1.bf16.msra.mxu0 %v1480
    %1498 = vmatprep.subr.bf16.mxu0 0
    %1499 = vmatpush1.bf16.msra.mxu0 %v1481
    %1500 = vmatprep.subr.bf16.mxu0 0
    %1501 = vmatpush1.bf16.msra.mxu0 %v1482
    %1502 = vmatprep.subr.bf16.mxu0 0
    %1503 = vmatpush1.bf16.msra.mxu0 %v1483
    %1504 = vmatprep.subr.bf16.mxu0 0
    %1505 = vmatpush1.bf16.msra.mxu0 %v1484
    %1506 = vmatprep.subr.bf16.mxu0 0
    %1507 = vmatpush1.bf16.msra.mxu0 %v1485
    %1508 = vmatprep.subr.bf16.mxu0 0
    %1509 = vmatpush1.bf16.msra.mxu0 %v1486
    %1510 = vmatprep.subr.bf16.mxu0 0
    %1511 = vmatpush1.bf16.msra.mxu0 %v1487
    %1512 = vmatprep.subr.bf16.mxu0 0
    %1513 = vmatpush1.bf16.msra.mxu0 0
    %1514 = vmatprep.subr.bf16.mxu0 0
    %1515 = vmatpush1.bf16.msra.mxu0 0
    %1516 = vmatprep.subr.bf16.mxu0 0
    %1517 = vmatpush1.bf16.msra.mxu0 0
    %1518 = vmatprep.subr.bf16.mxu0 0
    %1519 = vmatpush1.bf16.msra.mxu0 0
    %1520 = vmatprep.subr.bf16.mxu0 0
    %1521 = vmatpush1.bf16.msra.mxu0 0
    %1522 = vmatprep.subr.bf16.mxu0 0
    %1523 = vmatpush1.bf16.msra.mxu0 0
    %1524 = vmatprep.subr.bf16.mxu0 0
    %1525 = vmatpush1.bf16.msra.mxu0 0
    %1526 = vmatprep.subr.bf16.mxu0 0
    %1527 = vmatpush1.bf16.msra.mxu0 0
    %1528 = vmatprep.mubr.bf16.mxu0 0
    %1529 = vmatmul.mubr.bf16.gmra.mrb[0].mxu0 %v1421
    %v1530 = vpop.f32.mrb[0].mxu0
    %v1531 = vadd.f32 %v1446, %v1530
    %v1532 = vpop.f32.mrb[0].mxu0
    %v1533 = vpop.f32.mrb[0].mxu0
    %v1534 = vadd.f32 %v1446, %v1533
    %v1535 = vpop.f32.mrb[0].mxu0
    %1536 = vmatprep.mubr.bf16.mxu0 0
    %1537 = vmatmul.mubr.bf16.gmra.mrb[0].mxu0 %v1422
    %v1538 = vpop.f32.mrb[0].mxu0
    %v1539 = vadd.f32 %v1446, %v1538
    %v1540 = vpop.f32.mrb[0].mxu0
    %v1541 = vpop.f32.mrb[0].mxu0
    %v1542 = vadd.f32 %v1446, %v1541
    %v1543 = vpop.f32.mrb[0].mxu0
    %1544 = vmatprep.mubr.bf16.mxu0 0
    %1545 = vmatmul.mubr.bf16.gmra.mrb[0].mxu0 %v1423
    %v1546 = vpop.f32.mrb[0].mxu0
    %v1547 = vadd.f32 %v1446, %v1546
    %v1548 = vpop.f32.mrb[0].mxu0
    %v1549 = vpop.f32.mrb[0].mxu0
    %v1550 = vadd.f32 %v1446, %v1549
    %v1551 = vpop.f32.mrb[0].mxu0
    %1552 = vmatprep.mubr.bf16.mxu0 0
    %1553 = vmatmul.mubr.bf16.gmra.mrb[0].mxu0 %v1424
    %v1554 = vpop.f32.mrb[0].mxu0
    %v1555 = vadd.f32 %v1446, %v1554
    %v1556 = vpop.f32.mrb[0].mxu0
    %v1557 = vpop.f32.mrb[0].mxu0
    %v1558 = vadd.f32 %v1446, %v1557
    %v1559 = vpop.f32.mrb[0].mxu0
    %1560 = vdwg.mxu0
    %1561 = vst [vmem:[#allocation17] sm:$0xff] %v1531
    %1562 = vst [vmem:[#allocation17 + $0x8] sm:$0xff] %v1534
    %1563 = vst [vmem:[#allocation17 + $0x10] sm:$0xff] %v1539
    %1564 = vst [vmem:[#allocation17 + $0x18] sm:$0xff] %v1542
    %1565 = vst [vmem:[#allocation17 + $0x20] sm:$0xff] %v1547
    %1566 = vst [vmem:[#allocation17 + $0x28] sm:$0xff] %v1550
    %1567 = vst [vmem:[#allocation17 + $0x30] sm:$0xff] %v1555
    %1568 = vst [vmem:[#allocation17 + $0x38] sm:$0xff] %v1558
    %v1569 = vld [vmem:[#allocation2] sm:$0xff]
    %v1570 = vld [vmem:[#allocation2 + $0x8] sm:$0xff]
    %1571 = vst [vmem:[#allocation18] sm:$0xff] %v1569
    %1572 = vst [vmem:[#allocation18 + $0x8] sm:$0xff] %v1570
    // Predicated region
    $region84: #{tpu_custom_call.1} parent=1 // pred_check
      _
    $region85: #{tpu_custom_call.1} parent=1 // pred_check_branch
      %1574 = sbr.rel (0) target = $region87
    $region86: #{tpu_custom_call.1} parent=1 // pred_region
      %s1576 = ssub.s32 1024, 1024
      %1577 = vsyncadd [#allocation7], %s1576
      %s1578 = sshll.u32 [#allocation17], 4
      %s1579 = int_to_ptr.vmem [resolvable:$true] %s1578
      %1584 = dma.vmem_to_hbm [thread:$0]  %s1579, 1024, %s9, [#allocation7], 128, 128, 8
    $region87: #{tpu_custom_call.1} parent=1 // pred_fallthru
      _
    // Predicated region
    $region88: #{tpu_custom_call.1} parent=1 // pred_check
      _
    $region89: #{tpu_custom_call.1} parent=1 // pred_check_branch
      %1586 = sbr.rel (0) target = $region91
    $region90: #{tpu_custom_call.1} parent=1 // pred_region
      %s1588 = ssub.s32 256, 256
      %1589 = vsyncadd [#allocation19], %s1588
      %s1590 = sshll.u32 [#allocation18], 4
      %s1591 = int_to_ptr.vmem [resolvable:$true] %s1590
      %1596 = dma.vmem_to_hbm [thread:$0]  %s1591, 256, %s10, [#allocation19], 128, 128, 8
    $region91: #{tpu_custom_call.1} parent=1 // pred_fallthru
      _
    // Predicated region
    $region92: #{tpu_custom_call.1} parent=1 // pred_check
      _
    $region93: #{tpu_custom_call.1} parent=1 // pred_check_branch
      %1598 = sbr.rel (0) target = $region95
    $region94: #{tpu_custom_call.1} parent=1 // pred_region
      %1599 = dma.done [#allocation7], 1024
    $region95: #{tpu_custom_call.1} parent=1 // pred_fallthru
      _
    // Predicated region
    $region96: #{tpu_custom_call.1} parent=1 // pred_check
      _
    $region97: #{tpu_custom_call.1} parent=1 // pred_check_branch
      %1601 = sbr.rel (0) target = $region99
    $region98: #{tpu_custom_call.1} parent=1 // pred_region
      %1602 = dma.done [#allocation19], 256
    $region99: #{tpu_custom_call.1} parent=1 // pred_fallthru
      _
    %1603 = vsyncpa [#allocation6], 1
    %1604 = vsyncpa [#allocation9], 1
    %1605 = vsyncpa [#allocation12], 1
    %1606 = vsyncpa [#allocation15], 1
    %1607 = vsyncpa [#allocation7], 1
    %1608 = vsyncpa [#allocation19], 1

</llo_original>
